<compile_context>
chip_gen: v7x
topology: tpu7x:2x2x1
jax: 0.10.0
libtpu: 0.0.40
codegen_flags: <defaults>
</compile_context>

<pallas_src>
import math

import jax
import jax.numpy as jnp
from jax import lax
from jax.experimental import pallas as pl
from jax.experimental.pallas import tpu as pltpu

F32 = jnp.float32
BF16 = jnp.bfloat16
BN_EPS = 1e-5
INV_SQRT2 = 1.0 / math.sqrt(2.0)


# ----------------------------- fused Pallas kernel ---------------------------

def conv_block_kernel(x_ref, dww_ref, w2_ref, b2_ref, w3_ref, b3_ref, o_ref):
    """Fused ConvBlock for one batch element (NHWC, real channel count).

    x_ref  : (1, H, W, C) bf16   input block
    dww_ref: (9, C) f32          depthwise taps (kh*3+kw), BN scale folded in
    w2_ref : (C, F) bf16         conv2 weight (transposed), MXU operand
    b2_ref : (1, F) f32          conv2 bias with dw-bias + BN-shift folded in
    w3_ref : (F, C) bf16         conv3 weight (transposed) * layer_scale
    b3_ref : (1, C) f32          conv3 bias * layer_scale
    o_ref  : (1, H, W, C) bf16   output block
    """
    _, H, W, C = x_ref.shape
    x = x_ref[0].astype(jnp.float32)                          # (H, W, C)

    # ---- depthwise 3x3, halo built in VMEM ---------------------------------
    zrow = jnp.zeros((1, W, C), jnp.float32)
    xh = jnp.concatenate([zrow, x, zrow], axis=0)             # (H+2, W, C)
    zcol = jnp.zeros((H + 2, 1, C), jnp.float32)
    x_l = jnp.concatenate([zcol, xh[:, :W - 1, :]], axis=1)   # index w -> x[w-1]
    x_r = jnp.concatenate([xh[:, 1:, :], zcol], axis=1)       # index w -> x[w+1]
    cols = (x_l, xh, x_r)                                     # kw = 0, 1, 2

    dww = dww_ref[...]                                        # (9, C)
    acc = None
    for j in range(3):                                        # kernel column
        cj = cols[j]
        for i in range(3):                                    # kernel row (free slice)
            term = cj[i:i + H] * dww[i * 3 + j].reshape(1, 1, C)
            acc = term if acc is None else acc + term         # init from first tap

    # ---- 1x1 convs on the MXU (bf16 inputs, f32 accumulation) --------------
    m = acc.reshape(H * W, C).astype(BF16)
    h = jnp.dot(m, w2_ref[...], preferred_element_type=jnp.float32) + b2_ref[...]
    h = 0.5 * h * (1.0 + lax.erf(h * INV_SQRT2))              # exact-erf GELU
    z = jnp.dot(h.astype(BF16), w3_ref[...],
                preferred_element_type=jnp.float32) + b3_ref[...]

    # ---- layer_scale already folded into w3/b3; add residual (original x) --
    out = x.reshape(H * W, C) + z
    o_ref[...] = out.reshape(1, H, W, C).astype(o_ref.dtype)


# ----------------------------- wrapper ---------------------------------------

def conv_block_forward(params, x_nchw):
    """ConvBlock forward.  x_nchw: (B, dim, H, W) -> (B, dim, H, W)."""
    B, C, H, W = x_nchw.shape
    Fh = params["w2"].shape[1]

    # NCHW -> NHWC bf16 at the real channel count (no padding in HBM).  In a
    # real network the activations would already live in this layout/dtype.
    x = jnp.transpose(x_nchw, (0, 2, 3, 1)).astype(BF16)

    out = pl.pallas_call(
        conv_block_kernel,
        out_shape=jax.ShapeDtypeStruct((B, H, W, C), BF16),
        grid=(B,),
        in_specs=[
            pl.BlockSpec((1, H, W, C), lambda b: (b, 0, 0, 0)),
            pl.BlockSpec((9, C), lambda b: (0, 0)),
            pl.BlockSpec((C, Fh), lambda b: (0, 0)),
            pl.BlockSpec((1, Fh), lambda b: (0, 0)),
            pl.BlockSpec((Fh, C), lambda b: (0, 0)),
            pl.BlockSpec((1, C), lambda b: (0, 0)),
        ],
        out_specs=pl.BlockSpec((1, H, W, C), lambda b: (b, 0, 0, 0)),
        compiler_params=pltpu.CompilerParams(
            dimension_semantics=("parallel",)),
    )(x, params["dw"], params["w2"], params["b2"], params["w3"], params["b3"])

    return jnp.transpose(out, (0, 3, 1, 2)).astype(x_nchw.dtype)


# ----------------------------- parameters -------------------------------------

def _trunc_normal(key, shape, std=0.02):
    # trunc_normal_(std=std), truncated at +/- 2 std (PyTorch default).
    return std * jax.random.truncated_normal(key, -2.0, 2.0, shape, F32)


def make_raw_params(key, dim, hidden_dim=64, std=0.02):
    """Raw PyTorch-equivalent ConvBlock parameters (eval-mode BN stats)."""
    k1, k2, k3 = jax.random.split(key, 3)
    return dict(
        conv1_w=_trunc_normal(k1, (dim, 3, 3), std),        # (dim, 1, 3, 3) squeezed
        conv1_b=jnp.zeros((dim,), F32),
        bn_gamma=jnp.ones((dim,), F32),
        bn_beta=jnp.zeros((dim,), F32),
        bn_mean=jnp.zeros((dim,), F32),
        bn_var=jnp.ones((dim,), F32),
        conv2_w=_trunc_normal(k2, (hidden_dim, dim), std),  # (hidden, dim)
        conv2_b=jnp.zeros((hidden_dim,), F32),
        conv3_w=_trunc_normal(k3, (dim, hidden_dim), std),  # (dim, hidden)
        conv3_b=jnp.zeros((dim,), F32),
        layer_scale=jnp.ones((dim,), F32),
    )


def fold_params(raw):
    """Fold BN / biases / layer_scale into the kernel weight layout (zero extra
    per-element affine passes in the kernel)."""
    dim = raw["conv1_w"].shape[0]
    bn_s = raw["bn_gamma"] / jnp.sqrt(raw["bn_var"] + BN_EPS)
    bn_t = raw["bn_beta"] - raw["bn_mean"] * bn_s

    # Depthwise taps (9, C), row = kh*3 + kw, BN scale folded in.
    dw = jnp.transpose(raw["conv1_w"], (1, 2, 0)).reshape(9, dim) * bn_s[None, :]
    # conv2: h = acc @ W2^T + b2'   with   b2' = (dw_b*bn_s + bn_t) @ W2^T + b2.
    w2 = raw["conv2_w"].T                                          # (C, F)
    b2 = (raw["conv1_b"] * bn_s + bn_t) @ w2 + raw["conv2_b"]      # (F,)
    # conv3 with layer_scale folded: out = x + h @ (W3^T * ls) + ls * b3.
    w3 = raw["conv3_w"].T * raw["layer_scale"][None, :]            # (F, C)
    b3 = raw["layer_scale"] * raw["conv3_b"]                       # (C,)

    return dict(
        dw=dw.astype(F32),
        w2=w2.astype(BF16), b2=b2.reshape(1, -1).astype(F32),
        w3=w3.astype(BF16), b3=b3.reshape(1, -1).astype(F32),
    )


# ----------------------------- pure-JAX reference ------------------------------

def conv_block_reference(raw, x_nchw):
    """f32 reference of the PyTorch ConvBlock (eval-mode BN).  The input is
    quantised to bf16 first to mirror the kernel's HBM boundary."""
    x = jnp.transpose(x_nchw, (0, 2, 3, 1)).astype(BF16).astype(F32)   # NHWC
    B, H, W, C = x.shape
    w_dw = jnp.transpose(raw["conv1_w"], (1, 2, 0))                    # (3, 3, C)

    xp = jnp.pad(x, ((0, 0), (1, 1), (1, 1), (0, 0)))
    acc = jnp.zeros_like(x)
    for i in range(3):
        for j in range(3):
            acc = acc + xp[:, i:i + H, j:j + W, :] * w_dw[i, j]
    y = acc + raw["conv1_b"]
    bn_s = raw["bn_gamma"] / jnp.sqrt(raw["bn_var"] + BN_EPS)
    y = (y - raw["bn_mean"]) * bn_s + raw["bn_beta"]

    h = jnp.einsum("bhwc,fc->bhwf", y, raw["conv2_w"],
                   precision=lax.Precision.HIGHEST) + raw["conv2_b"]
    h = 0.5 * h * (1.0 + lax.erf(h * INV_SQRT2))
    z = jnp.einsum("bhwf,cf->bhwc", h, raw["conv3_w"],
                   precision=lax.Precision.HIGHEST) + raw["conv3_b"]
    out = x + raw["layer_scale"] * z
    return jnp.transpose(out, (0, 3, 1, 2))


# ----------------------------- main --------------------------------------------

if __name__ == "__main__":
    DIM, HIDDEN, B, H, W = 16, 64, 2, 16, 16

    key = jax.random.PRNGKey(0)
    kx, kp1, kp2 = jax.random.split(key, 3)
    x = jax.random.normal(kx, (B, DIM, H, W), F32)

    fwd = jax.jit(conv_block_forward)

    # 1) Module-faithful init (trunc_normal std=0.02, fresh BN stats, ls=1).
    raw1 = make_raw_params(kp1, DIM, HIDDEN, std=0.02)
    out1 = jax.block_until_ready(fwd(fold_params(raw1), x))
    assert out1.shape == (B, DIM, H, W), out1.shape
    assert bool(jnp.all(jnp.isfinite(out1)))
    ref1 = conv_block_reference(raw1, x)
    err1 = float(jnp.max(jnp.abs(out1 - ref1)))
    assert bool(jnp.allclose(out1, ref1, atol=2e-2, rtol=2e-2)), err1

    # 2) Larger-scale weights so the conv2/GELU/conv3 branch is numerically
    #    significant vs. the residual (stronger check of the fused MLP path
    #    and the affine folds); tolerance covers bf16 I/O + bf16 MXU inputs.
    raw2 = make_raw_params(kp2, DIM, HIDDEN, std=0.2)
    out2 = jax.block_until_ready(fwd(fold_params(raw2), x))
    assert bool(jnp.all(jnp.isfinite(out2)))
    ref2 = conv_block_reference(raw2, x)
    err2 = float(jnp.max(jnp.abs(out2 - ref2)))
    assert bool(jnp.allclose(out2, ref2, atol=5e-2, rtol=5e-2)), err2

    print("KERNEL_OK")
</pallas_src>

<mosaic_0001>
module attributes {stable_mosaic.version = 11 : i64} {
  func.func @conv_block_kernel(%arg0: i32, %arg1: memref<1x16x16x16xbf16, #tpu.memory_space<vmem>>, %arg2: memref<9x16xf32, #tpu.memory_space<vmem>>, %arg3: memref<16x64xbf16, #tpu.memory_space<vmem>>, %arg4: memref<1x64xf32, #tpu.memory_space<vmem>>, %arg5: memref<64x16xbf16, #tpu.memory_space<vmem>>, %arg6: memref<1x16xf32, #tpu.memory_space<vmem>>, %arg7: memref<1x16x16x16xbf16, #tpu.memory_space<vmem>>) attributes {dimension_semantics = [#tpu.dimension_semantics<parallel>], iteration_bounds = array<i64: 2>, scalar_prefetch = 0 : i64, scratch_operands = 0 : i64, tpu.core_type = #tpu.core_type<tc>, window_params = [{transform_indices = @transform_0, window_bounds = array<i64: 1, 16, 16, 16>}, {pipeline_mode = #tpu.pipeline_mode<synchronous>, transform_indices = @transform_1, window_bounds = array<i64: 9, 16>}, {pipeline_mode = #tpu.pipeline_mode<synchronous>, transform_indices = @transform_2, window_bounds = array<i64: 16, 64>}, {pipeline_mode = #tpu.pipeline_mode<synchronous>, transform_indices = @transform_3, window_bounds = array<i64: 1, 64>}, {pipeline_mode = #tpu.pipeline_mode<synchronous>, transform_indices = @transform_4, window_bounds = array<i64: 64, 16>}, {pipeline_mode = #tpu.pipeline_mode<synchronous>, transform_indices = @transform_5, window_bounds = array<i64: 1, 16>}, {transform_indices = @transform_6, window_bounds = array<i64: 1, 16, 16, 16>}]} {
    %c0 = arith.constant 0 : index
    %c0_0 = arith.constant 0 : index
    %c0_1 = arith.constant 0 : index
    %c0_2 = arith.constant 0 : index
    %0 = vector.load %arg1[%c0, %c0_0, %c0_1, %c0_2] : memref<1x16x16x16xbf16, #tpu.memory_space<vmem>>, vector<1x16x16x16xbf16>
    %1 = vector.shape_cast %0 : vector<1x16x16x16xbf16> to vector<16x16x16xbf16>
    %2 = arith.extf %1 : vector<16x16x16xbf16> to vector<16x16x16xf32>
    %cst = arith.constant 0.000000e+00 : f32
    %3 = vector.broadcast %cst : f32 to vector<1x16x16xf32>
    %4 = tpu.concatenate %3, %2, %3 in 0 : vector<1x16x16xf32>, vector<16x16x16xf32>, vector<1x16x16xf32> -> vector<18x16x16xf32>
    %cst_3 = arith.constant 0.000000e+00 : f32
    %5 = vector.broadcast %cst_3 : f32 to vector<18x1x16xf32>
    %6 = vector.extract_strided_slice %4 {offsets = [0, 0, 0], sizes = [18, 15, 16], strides = [1, 1, 1]} : vector<18x16x16xf32> to vector<18x15x16xf32>
    %7 = tpu.concatenate %5, %6 in 1 : vector<18x1x16xf32>, vector<18x15x16xf32> -> vector<18x16x16xf32>
    %8 = vector.extract_strided_slice %4 {offsets = [0, 1, 0], sizes = [18, 15, 16], strides = [1, 1, 1]} : vector<18x16x16xf32> to vector<18x15x16xf32>
    %9 = tpu.concatenate %8, %5 in 1 : vector<18x15x16xf32>, vector<18x1x16xf32> -> vector<18x16x16xf32>
    %c0_4 = arith.constant 0 : index
    %c0_5 = arith.constant 0 : index
    %10 = vector.load %arg2[%c0_4, %c0_5] : memref<9x16xf32, #tpu.memory_space<vmem>>, vector<9x16xf32>
    %11 = vector.extract_strided_slice %7 {offsets = [0, 0, 0], sizes = [16, 16, 16], strides = [1, 1, 1]} : vector<18x16x16xf32> to vector<16x16x16xf32>
    %12 = vector.extract_strided_slice %10 {offsets = [0, 0], sizes = [1, 16], strides = [1, 1]} : vector<9x16xf32> to vector<1x16xf32>
    %13 = vector.shape_cast %12 : vector<1x16xf32> to vector<16xf32>
    %14 = vector.shape_cast %13 : vector<16xf32> to vector<1x1x16xf32>
    %15 = vector.broadcast %14 : vector<1x1x16xf32> to vector<16x16x16xf32>
    %16 = arith.mulf %11, %15 : vector<16x16x16xf32>
    %17 = vector.extract_strided_slice %7 {offsets = [1, 0, 0], sizes = [16, 16, 16], strides = [1, 1, 1]} : vector<18x16x16xf32> to vector<16x16x16xf32>
    %18 = vector.extract_strided_slice %10 {offsets = [3, 0], sizes = [1, 16], strides = [1, 1]} : vector<9x16xf32> to vector<1x16xf32>
    %19 = vector.shape_cast %18 : vector<1x16xf32> to vector<16xf32>
    %20 = vector.shape_cast %19 : vector<16xf32> to vector<1x1x16xf32>
    %21 = vector.broadcast %20 : vector<1x1x16xf32> to vector<16x16x16xf32>
    %22 = arith.mulf %17, %21 : vector<16x16x16xf32>
    %23 = arith.addf %16, %22 : vector<16x16x16xf32>
    %24 = vector.extract_strided_slice %7 {offsets = [2, 0, 0], sizes = [16, 16, 16], strides = [1, 1, 1]} : vector<18x16x16xf32> to vector<16x16x16xf32>
    %25 = vector.extract_strided_slice %10 {offsets = [6, 0], sizes = [1, 16], strides = [1, 1]} : vector<9x16xf32> to vector<1x16xf32>
    %26 = vector.shape_cast %25 : vector<1x16xf32> to vector<16xf32>
    %27 = vector.shape_cast %26 : vector<16xf32> to vector<1x1x16xf32>
    %28 = vector.broadcast %27 : vector<1x1x16xf32> to vector<16x16x16xf32>
    %29 = arith.mulf %24, %28 : vector<16x16x16xf32>
    %30 = arith.addf %23, %29 : vector<16x16x16xf32>
    %31 = vector.extract_strided_slice %4 {offsets = [0, 0, 0], sizes = [16, 16, 16], strides = [1, 1, 1]} : vector<18x16x16xf32> to vector<16x16x16xf32>
    %32 = vector.extract_strided_slice %10 {offsets = [1, 0], sizes = [1, 16], strides = [1, 1]} : vector<9x16xf32> to vector<1x16xf32>
    %33 = vector.shape_cast %32 : vector<1x16xf32> to vector<16xf32>
    %34 = vector.shape_cast %33 : vector<16xf32> to vector<1x1x16xf32>
    %35 = vector.broadcast %34 : vector<1x1x16xf32> to vector<16x16x16xf32>
    %36 = arith.mulf %31, %35 : vector<16x16x16xf32>
    %37 = arith.addf %30, %36 : vector<16x16x16xf32>
    %38 = vector.extract_strided_slice %4 {offsets = [1, 0, 0], sizes = [16, 16, 16], strides = [1, 1, 1]} : vector<18x16x16xf32> to vector<16x16x16xf32>
    %39 = vector.extract_strided_slice %10 {offsets = [4, 0], sizes = [1, 16], strides = [1, 1]} : vector<9x16xf32> to vector<1x16xf32>
    %40 = vector.shape_cast %39 : vector<1x16xf32> to vector<16xf32>
    %41 = vector.shape_cast %40 : vector<16xf32> to vector<1x1x16xf32>
    %42 = vector.broadcast %41 : vector<1x1x16xf32> to vector<16x16x16xf32>
    %43 = arith.mulf %38, %42 : vector<16x16x16xf32>
    %44 = arith.addf %37, %43 : vector<16x16x16xf32>
    %45 = vector.extract_strided_slice %4 {offsets = [2, 0, 0], sizes = [16, 16, 16], strides = [1, 1, 1]} : vector<18x16x16xf32> to vector<16x16x16xf32>
    %46 = vector.extract_strided_slice %10 {offsets = [7, 0], sizes = [1, 16], strides = [1, 1]} : vector<9x16xf32> to vector<1x16xf32>
    %47 = vector.shape_cast %46 : vector<1x16xf32> to vector<16xf32>
    %48 = vector.shape_cast %47 : vector<16xf32> to vector<1x1x16xf32>
    %49 = vector.broadcast %48 : vector<1x1x16xf32> to vector<16x16x16xf32>
    %50 = arith.mulf %45, %49 : vector<16x16x16xf32>
    %51 = arith.addf %44, %50 : vector<16x16x16xf32>
    %52 = vector.extract_strided_slice %9 {offsets = [0, 0, 0], sizes = [16, 16, 16], strides = [1, 1, 1]} : vector<18x16x16xf32> to vector<16x16x16xf32>
    %53 = vector.extract_strided_slice %10 {offsets = [2, 0], sizes = [1, 16], strides = [1, 1]} : vector<9x16xf32> to vector<1x16xf32>
    %54 = vector.shape_cast %53 : vector<1x16xf32> to vector<16xf32>
    %55 = vector.shape_cast %54 : vector<16xf32> to vector<1x1x16xf32>
    %56 = vector.broadcast %55 : vector<1x1x16xf32> to vector<16x16x16xf32>
    %57 = arith.mulf %52, %56 : vector<16x16x16xf32>
    %58 = arith.addf %51, %57 : vector<16x16x16xf32>
    %59 = vector.extract_strided_slice %9 {offsets = [1, 0, 0], sizes = [16, 16, 16], strides = [1, 1, 1]} : vector<18x16x16xf32> to vector<16x16x16xf32>
    %60 = vector.extract_strided_slice %10 {offsets = [5, 0], sizes = [1, 16], strides = [1, 1]} : vector<9x16xf32> to vector<1x16xf32>
    %61 = vector.shape_cast %60 : vector<1x16xf32> to vector<16xf32>
    %62 = vector.shape_cast %61 : vector<16xf32> to vector<1x1x16xf32>
    %63 = vector.broadcast %62 : vector<1x1x16xf32> to vector<16x16x16xf32>
    %64 = arith.mulf %59, %63 : vector<16x16x16xf32>
    %65 = arith.addf %58, %64 : vector<16x16x16xf32>
    %66 = vector.extract_strided_slice %9 {offsets = [2, 0, 0], sizes = [16, 16, 16], strides = [1, 1, 1]} : vector<18x16x16xf32> to vector<16x16x16xf32>
    %67 = vector.extract_strided_slice %10 {offsets = [8, 0], sizes = [1, 16], strides = [1, 1]} : vector<9x16xf32> to vector<1x16xf32>
    %68 = vector.shape_cast %67 : vector<1x16xf32> to vector<16xf32>
    %69 = vector.shape_cast %68 : vector<16xf32> to vector<1x1x16xf32>
    %70 = vector.broadcast %69 : vector<1x1x16xf32> to vector<16x16x16xf32>
    %71 = arith.mulf %66, %70 : vector<16x16x16xf32>
    %72 = arith.addf %65, %71 : vector<16x16x16xf32>
    %73 = vector.shape_cast %72 : vector<16x16x16xf32> to vector<256x16xf32>
    %74 = arith.truncf %73 : vector<256x16xf32> to vector<256x16xbf16>
    %c0_6 = arith.constant 0 : index
    %c0_7 = arith.constant 0 : index
    %75 = vector.load %arg3[%c0_6, %c0_7] : memref<16x64xbf16, #tpu.memory_space<vmem>>, vector<16x64xbf16>
    %cst_8 = arith.constant dense<0.000000e+00> : vector<256x64xf32>
    %76 = tpu.matmul %74, %75, %cst_8 {dimension_numbers = #tpu.dot_dimension_numbers<[1], [0], [0], [1], [0, 0, 1, 1], [], []>} : vector<256x16xbf16>, vector<16x64xbf16>, vector<256x64xf32> -> vector<256x64xf32>
    %c0_9 = arith.constant 0 : index
    %c0_10 = arith.constant 0 : index
    %77 = vector.load %arg4[%c0_9, %c0_10] : memref<1x64xf32, #tpu.memory_space<vmem>>, vector<1x64xf32>
    %78 = vector.broadcast %77 : vector<1x64xf32> to vector<256x64xf32>
    %79 = arith.addf %76, %78 : vector<256x64xf32>
    %cst_11 = arith.constant 5.000000e-01 : f32
    %80 = vector.broadcast %cst_11 : f32 to vector<256x64xf32>
    %81 = arith.mulf %80, %79 : vector<256x64xf32>
    %cst_12 = arith.constant 0.707106769 : f32
    %82 = vector.broadcast %cst_12 : f32 to vector<256x64xf32>
    %83 = arith.mulf %79, %82 : vector<256x64xf32>
    %84 = math.erf %83 : vector<256x64xf32>
    %cst_13 = arith.constant 1.000000e+00 : f32
    %85 = vector.broadcast %cst_13 : f32 to vector<256x64xf32>
    %86 = arith.addf %85, %84 : vector<256x64xf32>
    %87 = arith.mulf %81, %86 : vector<256x64xf32>
    %88 = arith.truncf %87 : vector<256x64xf32> to vector<256x64xbf16>
    %c0_14 = arith.constant 0 : index
    %c0_15 = arith.constant 0 : index
    %89 = vector.load %arg5[%c0_14, %c0_15] : memref<64x16xbf16, #tpu.memory_space<vmem>>, vector<64x16xbf16>
    %cst_16 = arith.constant dense<0.000000e+00> : vector<256x16xf32>
    %90 = tpu.matmul %88, %89, %cst_16 {dimension_numbers = #tpu.dot_dimension_numbers<[1], [0], [0], [1], [0, 0, 1, 1], [], []>} : vector<256x64xbf16>, vector<64x16xbf16>, vector<256x16xf32> -> vector<256x16xf32>
    %c0_17 = arith.constant 0 : index
    %c0_18 = arith.constant 0 : index
    %91 = vector.load %arg6[%c0_17, %c0_18] : memref<1x16xf32, #tpu.memory_space<vmem>>, vector<1x16xf32>
    %92 = vector.broadcast %91 : vector<1x16xf32> to vector<256x16xf32>
    %93 = arith.addf %90, %92 : vector<256x16xf32>
    %94 = vector.shape_cast %2 : vector<16x16x16xf32> to vector<256x16xf32>
    %95 = arith.addf %94, %93 : vector<256x16xf32>
    %96 = vector.shape_cast %95 : vector<256x16xf32> to vector<1x16x16x16xf32>
    %97 = arith.truncf %96 : vector<1x16x16x16xf32> to vector<1x16x16x16xbf16>
    %c0_19 = arith.constant 0 : index
    %c0_20 = arith.constant 0 : index
    %c0_21 = arith.constant 0 : index
    %c0_22 = arith.constant 0 : index
    %98 = vector.load %arg7[%c0_19, %c0_20, %c0_21, %c0_22] : memref<1x16x16x16xbf16, #tpu.memory_space<vmem>>, vector<1x16x16x16xbf16>
    tpu.vector_store %arg7[%c0_19, %c0_20, %c0_21, %c0_22], %97 {strides = array<i32>} : memref<1x16x16x16xbf16, #tpu.memory_space<vmem>>, vector<1x16x16x16xbf16>,
    return
  }
  func.func @transform_0(%arg0: i32) -> (i32, i32, i32, i32) {
    %c0_i32 = arith.constant 0 : i32
    %c0_i32_0 = arith.constant 0 : i32
    %c0_i32_1 = arith.constant 0 : i32
    %c0_i32_2 = arith.constant 0 : i32
    return %arg0, %c0_i32, %c0_i32_0, %c0_i32_1 : i32, i32, i32, i32
  }
  func.func @transform_1(%arg0: i32) -> (i32, i32) {
    %c0_i32 = arith.constant 0 : i32
    %c0_i32_0 = arith.constant 0 : i32
    %c0_i32_1 = arith.constant 0 : i32
    return %c0_i32, %c0_i32_0 : i32, i32
  }
  func.func @transform_2(%arg0: i32) -> (i32, i32) {
    %c0_i32 = arith.constant 0 : i32
    %c0_i32_0 = arith.constant 0 : i32
    %c0_i32_1 = arith.constant 0 : i32
    return %c0_i32, %c0_i32_0 : i32, i32
  }
  func.func @transform_3(%arg0: i32) -> (i32, i32) {
    %c0_i32 = arith.constant 0 : i32
    %c0_i32_0 = arith.constant 0 : i32
    %c0_i32_1 = arith.constant 0 : i32
    return %c0_i32, %c0_i32_0 : i32, i32
  }
  func.func @transform_4(%arg0: i32) -> (i32, i32) {
    %c0_i32 = arith.constant 0 : i32
    %c0_i32_0 = arith.constant 0 : i32
    %c0_i32_1 = arith.constant 0 : i32
    return %c0_i32, %c0_i32_0 : i32, i32
  }
  func.func @transform_5(%arg0: i32) -> (i32, i32) {
    %c0_i32 = arith.constant 0 : i32
    %c0_i32_0 = arith.constant 0 : i32
    %c0_i32_1 = arith.constant 0 : i32
    return %c0_i32, %c0_i32_0 : i32, i32
  }
  func.func @transform_6(%arg0: i32) -> (i32, i32, i32, i32) {
    %c0_i32 = arith.constant 0 : i32
    %c0_i32_0 = arith.constant 0 : i32
    %c0_i32_1 = arith.constant 0 : i32
    %c0_i32_2 = arith.constant 0 : i32
    return %arg0, %c0_i32, %c0_i32_0, %c0_i32_1 : i32, i32, i32, i32
  }
}

</mosaic_0001>

<llo_original>
// kernel: conv_block_forward.1
$region0: #{conv_block_forward.1}
  #allocation0 [shape = 'u32[]', space=smem, size = 0x4, offset = 0x4, fixed_abs, tag = 'smem constant byte address 0x4 - core index']
  #allocation1 [shape = 'u32[144,128]{1,0:T(1,128)}', space=vmem, size = 0x12000, scoped, tag = 'internal scratch']
  %s0 = inlined_call_operand.vmem [shape: bf16[2,16,16,16], index: 0, kind: input, shape index: {}]
  %s1 = inlined_call_operand.vmem [shape: f32[9,16], index: 1, kind: input, shape index: {}]
  %s2 = inlined_call_operand.vmem [shape: bf16[16,64], index: 2, kind: input, shape index: {}]
  %s3 = inlined_call_operand.vmem [shape: f32[1,64], index: 3, kind: input, shape index: {}]
  %s4 = inlined_call_operand.vmem [shape: bf16[64,16], index: 4, kind: input, shape index: {}]
  %s5 = inlined_call_operand.vmem [shape: f32[1,16], index: 5, kind: input, shape index: {}]
  %s6 = inlined_call_operand.vmem [shape: bf16[2,16,16,16], index: 6, kind: output, shape index: {}]
  %s7 = sld [smem:[#allocation0]]
  $region57: #{conv_block_forward.1} parent=0
    _
  %s9 = ssub.s32 1, %s7
  %s10 = scalar_select 0, %s9, %s7
  loop: start=0, step=1, limit=4
  $region2: #{conv_block_forward.1} parent=0 // loop_pre_header
    _
  $region3: #{conv_block_forward.1} parent=0 // loop_header
    %s12 = sphi 0, %s16
    %p13 = scmp.ge.s32.totalorder %s12, 4
    %s22 = sphi 0, %s24
    %s25 = sphi 0, %s22
    %s26 = sphi 0, %s25
    %s42 = sphi 0, %s26
    %s46 = sphi 0, %s46
    %s48 = sphi 0, %s46
    %s49 = sphi 0, %s48
    %s63 = sphi 0, %s49
    %s67 = sphi 0, %s67
    %s69 = sphi 0, %s67
    %s70 = sphi 0, %s69
    %s84 = sphi 0, %s70
    %s88 = sphi 0, %s88
    %s90 = sphi 0, %s88
    %s91 = sphi 0, %s90
    %s105 = sphi 0, %s91
    %s109 = sphi 0, %s109
    %s111 = sphi 0, %s109
    %s112 = sphi 0, %s111
    %s126 = sphi 0, %s112
    %s130 = sphi 0, %s130
    %s132 = sphi 0, %s130
    %s133 = sphi 0, %s132
    %s147 = sphi 0, %s133
    %s153 = sphi 0, %s155
    %s156 = sphi 0, %s153
    %s157 = sphi 0, %s156
    %s173 = sphi 0, %s157
  $region4: #{conv_block_forward.1} parent=0 // loop_header_branch
    %15 = sbr.rel (%p13) target = $region8
  $region5: #{conv_block_forward.1} parent=0 // loop_body
    %s17 = ssub.s32 %s12, 1
    %s18 = ssub.s32 %s12, 2
    %s19 = sadd.s32 %s12, 1
    %s20 = ssub.s32 %s12, %s19
    %p21 = scmp.eq.s32.totalorder %s20, 0
    %s23 = sadd.s32 %s22, 1
    %s24 = scalar_select %p21, %s22, %s23
    %p27 = pneg %p21
    %p28 = scmp.eq.s32.totalorder %s12, 1
    %p29 = por %p27, %p28
    %p30 = scmp.ne.s32.totalorder %s22, %s25
    %p31 = scmp.eq.s32.totalorder %s12, 0
    %p32 = por %p30, %p31
    %p33 = scmp.ne.s32.totalorder %s22, %s25
    %p34 = scmp.eq.s32.totalorder %s17, 1
    %p35 = por %p33, %p34
    %p36 = scmp.ne.s32.totalorder %s25, %s26
    %p37 = scmp.eq.s32.totalorder %s17, 0
    %p38 = por %p36, %p37
    %p39 = scmp.ne.s32.totalorder %s25, %s26
    %p40 = scmp.eq.s32.totalorder %s18, 1
    %p41 = por %p39, %p40
    %p43 = scmp.ne.s32.totalorder %s26, %s42
    %p44 = scmp.eq.s32.totalorder %s18, 0
    %p45 = por %p43, %p44
    %s47 = sadd.s32 %s46, 1
    %p50 = scmp.eq.s32.totalorder %s12, 1
    %p51 = scmp.ne.s32.totalorder %s46, %s48
    %p52 = scmp.eq.s32.totalorder %s12, 0
    %p53 = por %p51, %p52
    %p54 = scmp.ne.s32.totalorder %s46, %s48
    %p55 = scmp.eq.s32.totalorder %s17, 1
    %p56 = por %p54, %p55
    %p57 = scmp.ne.s32.totalorder %s48, %s49
    %p58 = scmp.eq.s32.totalorder %s17, 0
    %p59 = por %p57, %p58
    %p60 = scmp.ne.s32.totalorder %s48, %s49
    %p61 = scmp.eq.s32.totalorder %s18, 1
    %p62 = por %p60, %p61
    %p64 = scmp.ne.s32.totalorder %s49, %s63
    %p65 = scmp.eq.s32.totalorder %s18, 0
    %p66 = por %p64, %p65
    %s68 = sadd.s32 %s67, 1
    %p71 = scmp.eq.s32.totalorder %s12, 1
    %p72 = scmp.ne.s32.totalorder %s67, %s69
    %p73 = scmp.eq.s32.totalorder %s12, 0
    %p74 = por %p72, %p73
    %p75 = scmp.ne.s32.totalorder %s67, %s69
    %p76 = scmp.eq.s32.totalorder %s17, 1
    %p77 = por %p75, %p76
    %p78 = scmp.ne.s32.totalorder %s69, %s70
    %p79 = scmp.eq.s32.totalorder %s17, 0
    %p80 = por %p78, %p79
    %p81 = scmp.ne.s32.totalorder %s69, %s70
    %p82 = scmp.eq.s32.totalorder %s18, 1
    %p83 = por %p81, %p82
    %p85 = scmp.ne.s32.totalorder %s70, %s84
    %p86 = scmp.eq.s32.totalorder %s18, 0
    %p87 = por %p85, %p86
    %s89 = sadd.s32 %s88, 1
    %p92 = scmp.eq.s32.totalorder %s12, 1
    %p93 = scmp.ne.s32.totalorder %s88, %s90
    %p94 = scmp.eq.s32.totalorder %s12, 0
    %p95 = por %p93, %p94
    %p96 = scmp.ne.s32.totalorder %s88, %s90
    %p97 = scmp.eq.s32.totalorder %s17, 1
    %p98 = por %p96, %p97
    %p99 = scmp.ne.s32.totalorder %s90, %s91
    %p100 = scmp.eq.s32.totalorder %s17, 0
    %p101 = por %p99, %p100
    %p102 = scmp.ne.s32.totalorder %s90, %s91
    %p103 = scmp.eq.s32.totalorder %s18, 1
    %p104 = por %p102, %p103
    %p106 = scmp.ne.s32.totalorder %s91, %s105
    %p107 = scmp.eq.s32.totalorder %s18, 0
    %p108 = por %p106, %p107
    %s110 = sadd.s32 %s109, 1
    %p113 = scmp.eq.s32.totalorder %s12, 1
    %p114 = scmp.ne.s32.totalorder %s109, %s111
    %p115 = scmp.eq.s32.totalorder %s12, 0
    %p116 = por %p114, %p115
    %p117 = scmp.ne.s32.totalorder %s109, %s111
    %p118 = scmp.eq.s32.totalorder %s17, 1
    %p119 = por %p117, %p118
    %p120 = scmp.ne.s32.totalorder %s111, %s112
    %p121 = scmp.eq.s32.totalorder %s17, 0
    %p122 = por %p120, %p121
    %p123 = scmp.ne.s32.totalorder %s111, %s112
    %p124 = scmp.eq.s32.totalorder %s18, 1
    %p125 = por %p123, %p124
    %p127 = scmp.ne.s32.totalorder %s112, %s126
    %p128 = scmp.eq.s32.totalorder %s18, 0
    %p129 = por %p127, %p128
    %s131 = sadd.s32 %s130, 1
    %p134 = scmp.eq.s32.totalorder %s12, 1
    %p135 = scmp.ne.s32.totalorder %s130, %s132
    %p136 = scmp.eq.s32.totalorder %s12, 0
    %p137 = por %p135, %p136
    %p138 = scmp.ne.s32.totalorder %s130, %s132
    %p139 = scmp.eq.s32.totalorder %s17, 1
    %p140 = por %p138, %p139
    %p141 = scmp.ne.s32.totalorder %s132, %s133
    %p142 = scmp.eq.s32.totalorder %s17, 0
    %p143 = por %p141, %p142
    %p144 = scmp.ne.s32.totalorder %s132, %s133
    %p145 = scmp.eq.s32.totalorder %s18, 1
    %p146 = por %p144, %p145
    %p148 = scmp.ne.s32.totalorder %s133, %s147
    %p149 = scmp.eq.s32.totalorder %s18, 0
    %p150 = por %p148, %p149
    %s151 = ssub.s32 %s12, %s19
    %p152 = scmp.eq.s32.totalorder %s151, 0
    %s154 = sadd.s32 %s153, 1
    %s155 = scalar_select %p152, %s153, %s154
    %p158 = pneg %p152
    %p159 = scmp.eq.s32.totalorder %s12, 1
    %p160 = por %p158, %p159
    %p161 = scmp.ne.s32.totalorder %s153, %s156
    %p162 = scmp.eq.s32.totalorder %s12, 0
    %p163 = por %p161, %p162
    %p164 = scmp.ne.s32.totalorder %s153, %s156
    %p165 = scmp.eq.s32.totalorder %s17, 1
    %p166 = por %p164, %p165
    %p167 = scmp.ne.s32.totalorder %s156, %s157
    %p168 = scmp.eq.s32.totalorder %s17, 0
    %p169 = por %p167, %p168
    %p170 = scmp.ne.s32.totalorder %s156, %s157
    %p171 = scmp.eq.s32.totalorder %s18, 1
    %p172 = por %p170, %p171
    %p174 = scmp.ne.s32.totalorder %s157, %s173
    %p175 = scmp.eq.s32.totalorder %s18, 0
    %p176 = por %p174, %p175
    %p177 = scmp.le.s32.totalorder 1, %s12
    %p178 = scmp.lt.s32.totalorder %s12, 3
    %p179 = pnand %p177, %p178
    %p180 = pneg %p179
    // Predicated region
    $region9: #{conv_block_forward.1} parent=5 // pred_check
      _
    $region10: #{conv_block_forward.1} parent=5 // pred_check_branch
      %182 = sbr.rel (%p179) target = $region12
    $region11: #{conv_block_forward.1} parent=5 // pred_region
      %s183 = ssub.s32 %s12, 1
      // Predicated region
      $region13: #{conv_block_forward.1} parent=11 // pred_check
        %p184 = pneg %p59
      $region14: #{conv_block_forward.1} parent=11 // pred_check_branch
        %186 = sbr.rel (%p184) target = $region16
      $region15: #{conv_block_forward.1} parent=11 // pred_region
        _
      $region16: #{conv_block_forward.1} parent=11 // pred_fallthru
        _
      // Predicated region
      $region17: #{conv_block_forward.1} parent=11 // pred_check
        %p187 = pneg %p80
      $region18: #{conv_block_forward.1} parent=11 // pred_check_branch
        %189 = sbr.rel (%p187) target = $region20
      $region19: #{conv_block_forward.1} parent=11 // pred_region
        _
      $region20: #{conv_block_forward.1} parent=11 // pred_fallthru
        _
      // Predicated region
      $region21: #{conv_block_forward.1} parent=11 // pred_check
        %p190 = pneg %p101
      $region22: #{conv_block_forward.1} parent=11 // pred_check_branch
        %192 = sbr.rel (%p190) target = $region24
      $region23: #{conv_block_forward.1} parent=11 // pred_region
        _
      $region24: #{conv_block_forward.1} parent=11 // pred_fallthru
        _
      // Predicated region
      $region25: #{conv_block_forward.1} parent=11 // pred_check
        %p193 = pneg %p122
      $region26: #{conv_block_forward.1} parent=11 // pred_check_branch
        %195 = sbr.rel (%p193) target = $region28
      $region27: #{conv_block_forward.1} parent=11 // pred_region
        _
      $region28: #{conv_block_forward.1} parent=11 // pred_fallthru
        _
      // Predicated region
      $region29: #{conv_block_forward.1} parent=11 // pred_check
        %p196 = pneg %p143
      $region30: #{conv_block_forward.1} parent=11 // pred_check_branch
        %198 = sbr.rel (%p196) target = $region32
      $region31: #{conv_block_forward.1} parent=11 // pred_region
        _
      $region32: #{conv_block_forward.1} parent=11 // pred_fallthru
        _
    $region12: #{conv_block_forward.1} parent=5 // pred_fallthru
      _
    %p199 = scmp.lt.s32.totalorder %s12, 2
    // Predicated region
    $region33: #{conv_block_forward.1} parent=5 // pred_check
      %p200 = pneg %p199
    $region34: #{conv_block_forward.1} parent=5 // pred_check_branch
      %202 = sbr.rel (%p200) target = $region36
    $region35: #{conv_block_forward.1} parent=5 // pred_region
      // Predicated region
      $region37: #{conv_block_forward.1} parent=35 // pred_check
        %p203 = pneg %p32
      $region38: #{conv_block_forward.1} parent=35 // pred_check_branch
        %205 = sbr.rel (%p203) target = $region40
      $region39: #{conv_block_forward.1} parent=35 // pred_region
        %p206 = scmp.lt.s32.totalorder %s12, 1
        %s207 = scalar_select %p206, %s12, 1
        %s208 = smul.addr %s207, 32
        %s209 = smul.addr %s208, 4
        %s210 = scalar_lea.vmem %s0, %s209
      $region40: #{conv_block_forward.1} parent=35 // pred_fallthru
        _
    $region36: #{conv_block_forward.1} parent=5 // pred_fallthru
      _
    %p211 = scmp.le.s32.totalorder 1, %s12
    %p212 = scmp.lt.s32.totalorder %s12, 3
    %p213 = pnand %p211, %p212
    %p214 = pneg %p213
    // Predicated region
    $region41: #{conv_block_forward.1} parent=5 // pred_check
      _
    $region42: #{conv_block_forward.1} parent=5 // pred_check_branch
      %216 = sbr.rel (%p213) target = $region44
    $region43: #{conv_block_forward.1} parent=5 // pred_region
      %s217 = ssub.s32 %s12, 1
      %p218 = scmp.lt.s32.totalorder %s17, 1
      %s219 = scalar_select %p218, %s17, 1
      %s220 = smul.addr %s219, 32
      %s221 = smul.addr %s220, 4
      %s222 = scalar_lea.vmem %s0, %s221
      %p223 = pneg %p38
      %p224 = pneg %p35
      %p225 = pneg %p59
      %p226 = pneg %p56
      %p227 = pneg %p80
      %p228 = pneg %p77
      %p229 = pneg %p101
      %p230 = pneg %p98
      %p231 = pneg %p122
      %p232 = pneg %p119
      %p233 = pneg %p143
      %p234 = pneg %p140
      %p235 = pneg %p169
      %p236 = pneg %p166
      %p237 = scmp.lt.s32.totalorder %s17, 1
      %s238 = scalar_select %p237, %s17, 1
      %s239 = smul.addr %s238, 32
      %s240 = smul.addr %s239, 4
      %s241 = scalar_lea.vmem %s6, %s240
      %p242 = scmp.lt.s32.totalorder %s17, 1
      %s243 = scalar_select %p242, %s17, 1
      %s244 = smul.addr %s243, 32
      %s245 = smul.addr %s244, 4
      %s246 = scalar_lea.vmem %s0, %s245
      %p247 = scmp.lt.s32.totalorder %s17, 1
      %s248 = scalar_select %p247, %s17, 1
      %s249 = smul.addr %s248, 32
      %s250 = smul.addr %s249, 4
      %s251 = scalar_lea.vmem %s6, %s250
      %v253 = vld [vmem:[%s246] sm:$0xf]
      %v254 = vld [vmem:[%s246 + $0x4] sm:$0xf]
      %v255 = vld [vmem:[%s246 + $0x8] sm:$0xf]
      %v256 = vld [vmem:[%s246 + $0xc] sm:$0xf]
      %v257 = vld [vmem:[%s246 + $0x10] sm:$0xf]
      %v258 = vld [vmem:[%s246 + $0x14] sm:$0xf]
      %v259 = vld [vmem:[%s246 + $0x18] sm:$0xf]
      %v260 = vld [vmem:[%s246 + $0x1c] sm:$0xf]
      %v261 = vld [vmem:[%s246 + $0x20] sm:$0xf]
      %v262 = vld [vmem:[%s246 + $0x24] sm:$0xf]
      %v263 = vld [vmem:[%s246 + $0x28] sm:$0xf]
      %v264 = vld [vmem:[%s246 + $0x2c] sm:$0xf]
      %v265 = vld [vmem:[%s246 + $0x30] sm:$0xf]
      %v266 = vld [vmem:[%s246 + $0x34] sm:$0xf]
      %v267 = vld [vmem:[%s246 + $0x38] sm:$0xf]
      %v268 = vld [vmem:[%s246 + $0x3c] sm:$0xf]
      %v269 = vld [vmem:[%s246 + $0x40] sm:$0xf]
      %v270 = vld [vmem:[%s246 + $0x44] sm:$0xf]
      %v271 = vld [vmem:[%s246 + $0x48] sm:$0xf]
      %v272 = vld [vmem:[%s246 + $0x4c] sm:$0xf]
      %v273 = vld [vmem:[%s246 + $0x50] sm:$0xf]
      %v274 = vld [vmem:[%s246 + $0x54] sm:$0xf]
      %v275 = vld [vmem:[%s246 + $0x58] sm:$0xf]
      %v276 = vld [vmem:[%s246 + $0x5c] sm:$0xf]
      %v277 = vld [vmem:[%s246 + $0x60] sm:$0xf]
      %v278 = vld [vmem:[%s246 + $0x64] sm:$0xf]
      %v279 = vld [vmem:[%s246 + $0x68] sm:$0xf]
      %v280 = vld [vmem:[%s246 + $0x6c] sm:$0xf]
      %v281 = vld [vmem:[%s246 + $0x70] sm:$0xf]
      %v282 = vld [vmem:[%s246 + $0x74] sm:$0xf]
      %v283 = vld [vmem:[%s246 + $0x78] sm:$0xf]
      %v284 = vld [vmem:[%s246 + $0x7c] sm:$0xf]
      %v285 = vunpack.c.l.bf16 %v253
      %v286 = vunpack.c.l.bf16 %v254
      %v287 = vunpack.c.l.bf16 %v255
      %v288 = vunpack.c.l.bf16 %v256
      %v289 = vunpack.c.l.bf16 %v257
      %v290 = vunpack.c.l.bf16 %v258
      %v291 = vunpack.c.l.bf16 %v259
      %v292 = vunpack.c.l.bf16 %v260
      %v293 = vunpack.c.l.bf16 %v261
      %v294 = vunpack.c.l.bf16 %v262
      %v295 = vunpack.c.l.bf16 %v263
      %v296 = vunpack.c.l.bf16 %v264
      %v297 = vunpack.c.l.bf16 %v265
      %v298 = vunpack.c.l.bf16 %v266
      %v299 = vunpack.c.l.bf16 %v267
      %v300 = vunpack.c.l.bf16 %v268
      %v301 = vunpack.c.l.bf16 %v269
      %v302 = vunpack.c.l.bf16 %v270
      %v303 = vunpack.c.l.bf16 %v271
      %v304 = vunpack.c.l.bf16 %v272
      %v305 = vunpack.c.l.bf16 %v273
      %v306 = vunpack.c.l.bf16 %v274
      %v307 = vunpack.c.l.bf16 %v275
      %v308 = vunpack.c.l.bf16 %v276
      %v309 = vunpack.c.l.bf16 %v277
      %v310 = vunpack.c.l.bf16 %v278
      %v311 = vunpack.c.l.bf16 %v279
      %v312 = vunpack.c.l.bf16 %v280
      %v313 = vunpack.c.l.bf16 %v281
      %v314 = vunpack.c.l.bf16 %v282
      %v315 = vunpack.c.l.bf16 %v283
      %v316 = vunpack.c.l.bf16 %v284
      %vm350 = vcmask 1040384
      %v351 = vrot.slane 0.0, 7
      %v352 = vsel %vm350, %v351, %v351
      %v353 = vrot.slane %v285, 7
      %v354 = vrot.slane %v286, 7
      %v355 = vsel %vm350, %v353, %v354
      %v356 = vrot.slane %v287, 7
      %v357 = vrot.slane %v288, 7
      %v358 = vsel %vm350, %v356, %v357
      %v359 = vrot.slane %v289, 7
      %v360 = vrot.slane %v290, 7
      %v361 = vsel %vm350, %v359, %v360
      %v362 = vrot.slane %v291, 7
      %v363 = vrot.slane %v292, 7
      %v364 = vsel %vm350, %v362, %v363
      %v365 = vrot.slane %v293, 7
      %v366 = vrot.slane %v294, 7
      %v367 = vsel %vm350, %v365, %v366
      %v368 = vrot.slane %v295, 7
      %v369 = vrot.slane %v296, 7
      %v370 = vsel %vm350, %v368, %v369
      %v371 = vrot.slane %v297, 7
      %v372 = vrot.slane %v298, 7
      %v373 = vsel %vm350, %v371, %v372
      %v374 = vrot.slane %v299, 7
      %v375 = vrot.slane %v300, 7
      %v376 = vsel %vm350, %v374, %v375
      %v377 = vrot.slane %v301, 7
      %v378 = vrot.slane %v302, 7
      %v379 = vsel %vm350, %v377, %v378
      %v380 = vrot.slane %v303, 7
      %v381 = vrot.slane %v304, 7
      %v382 = vsel %vm350, %v380, %v381
      %v383 = vrot.slane %v305, 7
      %v384 = vrot.slane %v306, 7
      %v385 = vsel %vm350, %v383, %v384
      %v386 = vrot.slane %v307, 7
      %v387 = vrot.slane %v308, 7
      %v388 = vsel %vm350, %v386, %v387
      %v389 = vrot.slane %v309, 7
      %v390 = vrot.slane %v310, 7
      %v391 = vsel %vm350, %v389, %v390
      %v392 = vrot.slane %v311, 7
      %v393 = vrot.slane %v312, 7
      %v394 = vsel %vm350, %v392, %v393
      %v395 = vrot.slane %v313, 7
      %v396 = vrot.slane %v314, 7
      %v397 = vsel %vm350, %v395, %v396
      %v398 = vrot.slane %v315, 7
      %v399 = vrot.slane %v316, 7
      %v400 = vsel %vm350, %v398, %v399
      %v435 = vsel %vm350, 0.0, %v351
      %v436 = vsel %vm350, 0.0, %v353
      %v437 = vsel %vm350, 0.0, %v356
      %v438 = vsel %vm350, 0.0, %v359
      %v439 = vsel %vm350, 0.0, %v362
      %v440 = vsel %vm350, 0.0, %v365
      %v441 = vsel %vm350, 0.0, %v368
      %v442 = vsel %vm350, 0.0, %v371
      %v443 = vsel %vm350, 0.0, %v374
      %v444 = vsel %vm350, 0.0, %v377
      %v445 = vsel %vm350, 0.0, %v380
      %v446 = vsel %vm350, 0.0, %v383
      %v447 = vsel %vm350, 0.0, %v386
      %v448 = vsel %vm350, 0.0, %v389
      %v449 = vsel %vm350, 0.0, %v392
      %v450 = vsel %vm350, 0.0, %v395
      %v451 = vsel %vm350, 0.0, %v398
      %vm452 = vcmask 1046528
      %v453 = vrot.slane 0.0, 1
      %v454 = vsel %vm452, %v453, %v453
      %v455 = vrot.slane %v285, 1
      %v456 = vrot.slane %v286, 1
      %v457 = vsel %vm452, %v455, %v456
      %v458 = vrot.slane %v287, 1
      %v459 = vrot.slane %v288, 1
      %v460 = vsel %vm452, %v458, %v459
      %v461 = vrot.slane %v289, 1
      %v462 = vrot.slane %v290, 1
      %v463 = vsel %vm452, %v461, %v462
      %v464 = vrot.slane %v291, 1
      %v465 = vrot.slane %v292, 1
      %v466 = vsel %vm452, %v464, %v465
      %v467 = vrot.slane %v293, 1
      %v468 = vrot.slane %v294, 1
      %v469 = vsel %vm452, %v467, %v468
      %v470 = vrot.slane %v295, 1
      %v471 = vrot.slane %v296, 1
      %v472 = vsel %vm452, %v470, %v471
      %v473 = vrot.slane %v297, 1
      %v474 = vrot.slane %v298, 1
      %v475 = vsel %vm452, %v473, %v474
      %v476 = vrot.slane %v299, 1
      %v477 = vrot.slane %v300, 1
      %v478 = vsel %vm452, %v476, %v477
      %v479 = vrot.slane %v301, 1
      %v480 = vrot.slane %v302, 1
      %v481 = vsel %vm452, %v479, %v480
      %v482 = vrot.slane %v303, 1
      %v483 = vrot.slane %v304, 1
      %v484 = vsel %vm452, %v482, %v483
      %v485 = vrot.slane %v305, 1
      %v486 = vrot.slane %v306, 1
      %v487 = vsel %vm452, %v485, %v486
      %v488 = vrot.slane %v307, 1
      %v489 = vrot.slane %v308, 1
      %v490 = vsel %vm452, %v488, %v489
      %v491 = vrot.slane %v309, 1
      %v492 = vrot.slane %v310, 1
      %v493 = vsel %vm452, %v491, %v492
      %v494 = vrot.slane %v311, 1
      %v495 = vrot.slane %v312, 1
      %v496 = vsel %vm452, %v494, %v495
      %v497 = vrot.slane %v313, 1
      %v498 = vrot.slane %v314, 1
      %v499 = vsel %vm452, %v497, %v498
      %v500 = vrot.slane %v315, 1
      %v501 = vrot.slane %v316, 1
      %v502 = vsel %vm452, %v500, %v501
      %v537 = vsel %vm452, %v453, 0.0
      %v538 = vsel %vm452, %v456, 0.0
      %v539 = vsel %vm452, %v459, 0.0
      %v540 = vsel %vm452, %v462, 0.0
      %v541 = vsel %vm452, %v465, 0.0
      %v542 = vsel %vm452, %v468, 0.0
      %v543 = vsel %vm452, %v471, 0.0
      %v544 = vsel %vm452, %v474, 0.0
      %v545 = vsel %vm452, %v477, 0.0
      %v546 = vsel %vm452, %v480, 0.0
      %v547 = vsel %vm452, %v483, 0.0
      %v548 = vsel %vm452, %v486, 0.0
      %v549 = vsel %vm452, %v489, 0.0
      %v550 = vsel %vm452, %v492, 0.0
      %v551 = vsel %vm452, %v495, 0.0
      %v552 = vsel %vm452, %v498, 0.0
      %v553 = vsel %vm452, %v501, 0.0
      %v554 = vld [vmem:[%s1] sm:$0xff]
      %v555 = vld [vmem:[%s1 + $0x8] sm:$0x1]
      %v556 = vlaneseq
      %v557 = vshrl.u32 %v556, 7
      %v558 = vsub.s32 0, %v557
      %v559 = vrot.slane %v554, %v558
      %v560 = vmul.f32 %v435, %v559
      %v561 = vmul.f32 %v352, %v559
      %v562 = vmul.f32 %v436, %v559
      %v563 = vmul.f32 %v355, %v559
      %v564 = vmul.f32 %v437, %v559
      %v565 = vmul.f32 %v358, %v559
      %v566 = vmul.f32 %v438, %v559
      %v567 = vmul.f32 %v361, %v559
      %v568 = vmul.f32 %v439, %v559
      %v569 = vmul.f32 %v364, %v559
      %v570 = vmul.f32 %v440, %v559
      %v571 = vmul.f32 %v367, %v559
      %v572 = vmul.f32 %v441, %v559
      %v573 = vmul.f32 %v370, %v559
      %v574 = vmul.f32 %v442, %v559
      %v575 = vmul.f32 %v373, %v559
      %v576 = vmul.f32 %v443, %v559
      %v577 = vmul.f32 %v376, %v559
      %v578 = vmul.f32 %v444, %v559
      %v579 = vmul.f32 %v379, %v559
      %v580 = vmul.f32 %v445, %v559
      %v581 = vmul.f32 %v382, %v559
      %v582 = vmul.f32 %v446, %v559
      %v583 = vmul.f32 %v385, %v559
      %v584 = vmul.f32 %v447, %v559
      %v585 = vmul.f32 %v388, %v559
      %v586 = vmul.f32 %v448, %v559
      %v587 = vmul.f32 %v391, %v559
      %v588 = vmul.f32 %v449, %v559
      %v589 = vmul.f32 %v394, %v559
      %v590 = vmul.f32 %v450, %v559
      %v591 = vmul.f32 %v397, %v559
      %v592 = vlaneseq
      %v593 = vshrl.u32 %v592, 7
      %v594 = vsub.s32 3, %v593
      %v595 = vrot.slane %v554, %v594
      %v596 = vmul.f32 %v436, %v595
      %v597 = vmul.f32 %v355, %v595
      %v598 = vmul.f32 %v437, %v595
      %v599 = vmul.f32 %v358, %v595
      %v600 = vmul.f32 %v438, %v595
      %v601 = vmul.f32 %v361, %v595
      %v602 = vmul.f32 %v439, %v595
      %v603 = vmul.f32 %v364, %v595
      %v604 = vmul.f32 %v440, %v595
      %v605 = vmul.f32 %v367, %v595
      %v606 = vmul.f32 %v441, %v595
      %v607 = vmul.f32 %v370, %v595
      %v608 = vmul.f32 %v442, %v595
      %v609 = vmul.f32 %v373, %v595
      %v610 = vmul.f32 %v443, %v595
      %v611 = vmul.f32 %v376, %v595
      %v612 = vmul.f32 %v444, %v595
      %v613 = vmul.f32 %v379, %v595
      %v614 = vmul.f32 %v445, %v595
      %v615 = vmul.f32 %v382, %v595
      %v616 = vmul.f32 %v446, %v595
      %v617 = vmul.f32 %v385, %v595
      %v618 = vmul.f32 %v447, %v595
      %v619 = vmul.f32 %v388, %v595
      %v620 = vmul.f32 %v448, %v595
      %v621 = vmul.f32 %v391, %v595
      %v622 = vmul.f32 %v449, %v595
      %v623 = vmul.f32 %v394, %v595
      %v624 = vmul.f32 %v450, %v595
      %v625 = vmul.f32 %v397, %v595
      %v626 = vmul.f32 %v451, %v595
      %v627 = vmul.f32 %v400, %v595
      %v628 = vadd.f32 %v560, %v596
      %v629 = vadd.f32 %v561, %v597
      %v630 = vadd.f32 %v562, %v598
      %v631 = vadd.f32 %v563, %v599
      %v632 = vadd.f32 %v564, %v600
      %v633 = vadd.f32 %v565, %v601
      %v634 = vadd.f32 %v566, %v602
      %v635 = vadd.f32 %v567, %v603
      %v636 = vadd.f32 %v568, %v604
      %v637 = vadd.f32 %v569, %v605
      %v638 = vadd.f32 %v570, %v606
      %v639 = vadd.f32 %v571, %v607
      %v640 = vadd.f32 %v572, %v608
      %v641 = vadd.f32 %v573, %v609
      %v642 = vadd.f32 %v574, %v610
      %v643 = vadd.f32 %v575, %v611
      %v644 = vadd.f32 %v576, %v612
      %v645 = vadd.f32 %v577, %v613
      %v646 = vadd.f32 %v578, %v614
      %v647 = vadd.f32 %v579, %v615
      %v648 = vadd.f32 %v580, %v616
      %v649 = vadd.f32 %v581, %v617
      %v650 = vadd.f32 %v582, %v618
      %v651 = vadd.f32 %v583, %v619
      %v652 = vadd.f32 %v584, %v620
      %v653 = vadd.f32 %v585, %v621
      %v654 = vadd.f32 %v586, %v622
      %v655 = vadd.f32 %v587, %v623
      %v656 = vadd.f32 %v588, %v624
      %v657 = vadd.f32 %v589, %v625
      %v658 = vadd.f32 %v590, %v626
      %v659 = vadd.f32 %v591, %v627
      %v660 = vlaneseq
      %v661 = vshrl.u32 %v660, 7
      %v662 = vsub.s32 6, %v661
      %v663 = vrot.slane %v554, %v662
      %v664 = vmul.f32 %v437, %v663
      %v665 = vmul.f32 %v358, %v663
      %v666 = vmul.f32 %v438, %v663
      %v667 = vmul.f32 %v361, %v663
      %v668 = vmul.f32 %v439, %v663
      %v669 = vmul.f32 %v364, %v663
      %v670 = vmul.f32 %v440, %v663
      %v671 = vmul.f32 %v367, %v663
      %v672 = vmul.f32 %v441, %v663
      %v673 = vmul.f32 %v370, %v663
      %v674 = vmul.f32 %v442, %v663
      %v675 = vmul.f32 %v373, %v663
      %v676 = vmul.f32 %v443, %v663
      %v677 = vmul.f32 %v376, %v663
      %v678 = vmul.f32 %v444, %v663
      %v679 = vmul.f32 %v379, %v663
      %v680 = vmul.f32 %v445, %v663
      %v681 = vmul.f32 %v382, %v663
      %v682 = vmul.f32 %v446, %v663
      %v683 = vmul.f32 %v385, %v663
      %v684 = vmul.f32 %v447, %v663
      %v685 = vmul.f32 %v388, %v663
      %v686 = vmul.f32 %v448, %v663
      %v687 = vmul.f32 %v391, %v663
      %v688 = vmul.f32 %v449, %v663
      %v689 = vmul.f32 %v394, %v663
      %v690 = vmul.f32 %v450, %v663
      %v691 = vmul.f32 %v397, %v663
      %v692 = vmul.f32 %v451, %v663
      %v693 = vmul.f32 %v400, %v663
      %v694 = vmul.f32 %v435, %v663
      %v695 = vmul.f32 %v352, %v663
      %v696 = vadd.f32 %v628, %v664
      %v697 = vadd.f32 %v629, %v665
      %v698 = vadd.f32 %v630, %v666
      %v699 = vadd.f32 %v631, %v667
      %v700 = vadd.f32 %v632, %v668
      %v701 = vadd.f32 %v633, %v669
      %v702 = vadd.f32 %v634, %v670
      %v703 = vadd.f32 %v635, %v671
      %v704 = vadd.f32 %v636, %v672
      %v705 = vadd.f32 %v637, %v673
      %v706 = vadd.f32 %v638, %v674
      %v707 = vadd.f32 %v639, %v675
      %v708 = vadd.f32 %v640, %v676
      %v709 = vadd.f32 %v641, %v677
      %v710 = vadd.f32 %v642, %v678
      %v711 = vadd.f32 %v643, %v679
      %v712 = vadd.f32 %v644, %v680
      %v713 = vadd.f32 %v645, %v681
      %v714 = vadd.f32 %v646, %v682
      %v715 = vadd.f32 %v647, %v683
      %v716 = vadd.f32 %v648, %v684
      %v717 = vadd.f32 %v649, %v685
      %v718 = vadd.f32 %v650, %v686
      %v719 = vadd.f32 %v651, %v687
      %v720 = vadd.f32 %v652, %v688
      %v721 = vadd.f32 %v653, %v689
      %v722 = vadd.f32 %v654, %v690
      %v723 = vadd.f32 %v655, %v691
      %v724 = vadd.f32 %v656, %v692
      %v725 = vadd.f32 %v657, %v693
      %v726 = vadd.f32 %v658, %v694
      %v727 = vadd.f32 %v659, %v695
      %v728 = vlaneseq
      %v729 = vshrl.u32 %v728, 7
      %v730 = vsub.s32 1, %v729
      %v731 = vrot.slane %v554, %v730
      %v732 = vmul.f32 %v731, 0.0
      %v733 = vmul.f32 %v285, %v731
      %v734 = vmul.f32 %v286, %v731
      %v735 = vmul.f32 %v287, %v731
      %v736 = vmul.f32 %v288, %v731
      %v737 = vmul.f32 %v289, %v731
      %v738 = vmul.f32 %v290, %v731
      %v739 = vmul.f32 %v291, %v731
      %v740 = vmul.f32 %v292, %v731
      %v741 = vmul.f32 %v293, %v731
      %v742 = vmul.f32 %v294, %v731
      %v743 = vmul.f32 %v295, %v731
      %v744 = vmul.f32 %v296, %v731
      %v745 = vmul.f32 %v297, %v731
      %v746 = vmul.f32 %v298, %v731
      %v747 = vmul.f32 %v299, %v731
      %v748 = vmul.f32 %v300, %v731
      %v749 = vmul.f32 %v301, %v731
      %v750 = vmul.f32 %v302, %v731
      %v751 = vmul.f32 %v303, %v731
      %v752 = vmul.f32 %v304, %v731
      %v753 = vmul.f32 %v305, %v731
      %v754 = vmul.f32 %v306, %v731
      %v755 = vmul.f32 %v307, %v731
      %v756 = vmul.f32 %v308, %v731
      %v757 = vmul.f32 %v309, %v731
      %v758 = vmul.f32 %v310, %v731
      %v759 = vmul.f32 %v311, %v731
      %v760 = vmul.f32 %v312, %v731
      %v761 = vmul.f32 %v313, %v731
      %v762 = vmul.f32 %v314, %v731
      %v763 = vadd.f32 %v696, %v732
      %v764 = vadd.f32 %v697, %v732
      %v765 = vadd.f32 %v698, %v733
      %v766 = vadd.f32 %v699, %v734
      %v767 = vadd.f32 %v700, %v735
      %v768 = vadd.f32 %v701, %v736
      %v769 = vadd.f32 %v702, %v737
      %v770 = vadd.f32 %v703, %v738
      %v771 = vadd.f32 %v704, %v739
      %v772 = vadd.f32 %v705, %v740
      %v773 = vadd.f32 %v706, %v741
      %v774 = vadd.f32 %v707, %v742
      %v775 = vadd.f32 %v708, %v743
      %v776 = vadd.f32 %v709, %v744
      %v777 = vadd.f32 %v710, %v745
      %v778 = vadd.f32 %v711, %v746
      %v779 = vadd.f32 %v712, %v747
      %v780 = vadd.f32 %v713, %v748
      %v781 = vadd.f32 %v714, %v749
      %v782 = vadd.f32 %v715, %v750
      %v783 = vadd.f32 %v716, %v751
      %v784 = vadd.f32 %v717, %v752
      %v785 = vadd.f32 %v718, %v753
      %v786 = vadd.f32 %v719, %v754
      %v787 = vadd.f32 %v720, %v755
      %v788 = vadd.f32 %v721, %v756
      %v789 = vadd.f32 %v722, %v757
      %v790 = vadd.f32 %v723, %v758
      %v791 = vadd.f32 %v724, %v759
      %v792 = vadd.f32 %v725, %v760
      %v793 = vadd.f32 %v726, %v761
      %v794 = vadd.f32 %v727, %v762
      %v795 = vlaneseq
      %v796 = vshrl.u32 %v795, 7
      %v797 = vsub.s32 4, %v796
      %v798 = vrot.slane %v554, %v797
      %v799 = vmul.f32 %v285, %v798
      %v800 = vmul.f32 %v286, %v798
      %v801 = vmul.f32 %v287, %v798
      %v802 = vmul.f32 %v288, %v798
      %v803 = vmul.f32 %v289, %v798
      %v804 = vmul.f32 %v290, %v798
      %v805 = vmul.f32 %v291, %v798
      %v806 = vmul.f32 %v292, %v798
      %v807 = vmul.f32 %v293, %v798
      %v808 = vmul.f32 %v294, %v798
      %v809 = vmul.f32 %v295, %v798
      %v810 = vmul.f32 %v296, %v798
      %v811 = vmul.f32 %v297, %v798
      %v812 = vmul.f32 %v298, %v798
      %v813 = vmul.f32 %v299, %v798
      %v814 = vmul.f32 %v300, %v798
      %v815 = vmul.f32 %v301, %v798
      %v816 = vmul.f32 %v302, %v798
      %v817 = vmul.f32 %v303, %v798
      %v818 = vmul.f32 %v304, %v798
      %v819 = vmul.f32 %v305, %v798
      %v820 = vmul.f32 %v306, %v798
      %v821 = vmul.f32 %v307, %v798
      %v822 = vmul.f32 %v308, %v798
      %v823 = vmul.f32 %v309, %v798
      %v824 = vmul.f32 %v310, %v798
      %v825 = vmul.f32 %v311, %v798
      %v826 = vmul.f32 %v312, %v798
      %v827 = vmul.f32 %v313, %v798
      %v828 = vmul.f32 %v314, %v798
      %v829 = vmul.f32 %v315, %v798
      %v830 = vmul.f32 %v316, %v798
      %v831 = vadd.f32 %v763, %v799
      %v832 = vadd.f32 %v764, %v800
      %v833 = vadd.f32 %v765, %v801
      %v834 = vadd.f32 %v766, %v802
      %v835 = vadd.f32 %v767, %v803
      %v836 = vadd.f32 %v768, %v804
      %v837 = vadd.f32 %v769, %v805
      %v838 = vadd.f32 %v770, %v806
      %v839 = vadd.f32 %v771, %v807
      %v840 = vadd.f32 %v772, %v808
      %v841 = vadd.f32 %v773, %v809
      %v842 = vadd.f32 %v774, %v810
      %v843 = vadd.f32 %v775, %v811
      %v844 = vadd.f32 %v776, %v812
      %v845 = vadd.f32 %v777, %v813
      %v846 = vadd.f32 %v778, %v814
      %v847 = vadd.f32 %v779, %v815
      %v848 = vadd.f32 %v780, %v816
      %v849 = vadd.f32 %v781, %v817
      %v850 = vadd.f32 %v782, %v818
      %v851 = vadd.f32 %v783, %v819
      %v852 = vadd.f32 %v784, %v820
      %v853 = vadd.f32 %v785, %v821
      %v854 = vadd.f32 %v786, %v822
      %v855 = vadd.f32 %v787, %v823
      %v856 = vadd.f32 %v788, %v824
      %v857 = vadd.f32 %v789, %v825
      %v858 = vadd.f32 %v790, %v826
      %v859 = vadd.f32 %v791, %v827
      %v860 = vadd.f32 %v792, %v828
      %v861 = vadd.f32 %v793, %v829
      %v862 = vadd.f32 %v794, %v830
      %v863 = vlaneseq
      %v864 = vshrl.u32 %v863, 7
      %v865 = vsub.s32 7, %v864
      %v866 = vrot.slane %v554, %v865
      %v867 = vmul.f32 %v287, %v866
      %v868 = vmul.f32 %v288, %v866
      %v869 = vmul.f32 %v289, %v866
      %v870 = vmul.f32 %v290, %v866
      %v871 = vmul.f32 %v291, %v866
      %v872 = vmul.f32 %v292, %v866
      %v873 = vmul.f32 %v293, %v866
      %v874 = vmul.f32 %v294, %v866
      %v875 = vmul.f32 %v295, %v866
      %v876 = vmul.f32 %v296, %v866
      %v877 = vmul.f32 %v297, %v866
      %v878 = vmul.f32 %v298, %v866
      %v879 = vmul.f32 %v299, %v866
      %v880 = vmul.f32 %v300, %v866
      %v881 = vmul.f32 %v301, %v866
      %v882 = vmul.f32 %v302, %v866
      %v883 = vmul.f32 %v303, %v866
      %v884 = vmul.f32 %v304, %v866
      %v885 = vmul.f32 %v305, %v866
      %v886 = vmul.f32 %v306, %v866
      %v887 = vmul.f32 %v307, %v866
      %v888 = vmul.f32 %v308, %v866
      %v889 = vmul.f32 %v309, %v866
      %v890 = vmul.f32 %v310, %v866
      %v891 = vmul.f32 %v311, %v866
      %v892 = vmul.f32 %v312, %v866
      %v893 = vmul.f32 %v313, %v866
      %v894 = vmul.f32 %v314, %v866
      %v895 = vmul.f32 %v315, %v866
      %v896 = vmul.f32 %v316, %v866
      %v897 = vmul.f32 %v866, 0.0
      %v898 = vadd.f32 %v831, %v867
      %v899 = vadd.f32 %v832, %v868
      %v900 = vadd.f32 %v833, %v869
      %v901 = vadd.f32 %v834, %v870
      %v902 = vadd.f32 %v835, %v871
      %v903 = vadd.f32 %v836, %v872
      %v904 = vadd.f32 %v837, %v873
      %v905 = vadd.f32 %v838, %v874
      %v906 = vadd.f32 %v839, %v875
      %v907 = vadd.f32 %v840, %v876
      %v908 = vadd.f32 %v841, %v877
      %v909 = vadd.f32 %v842, %v878
      %v910 = vadd.f32 %v843, %v879
      %v911 = vadd.f32 %v844, %v880
      %v912 = vadd.f32 %v845, %v881
      %v913 = vadd.f32 %v846, %v882
      %v914 = vadd.f32 %v847, %v883
      %v915 = vadd.f32 %v848, %v884
      %v916 = vadd.f32 %v849, %v885
      %v917 = vadd.f32 %v850, %v886
      %v918 = vadd.f32 %v851, %v887
      %v919 = vadd.f32 %v852, %v888
      %v920 = vadd.f32 %v853, %v889
      %v921 = vadd.f32 %v854, %v890
      %v922 = vadd.f32 %v855, %v891
      %v923 = vadd.f32 %v856, %v892
      %v924 = vadd.f32 %v857, %v893
      %v925 = vadd.f32 %v858, %v894
      %v926 = vadd.f32 %v859, %v895
      %v927 = vadd.f32 %v860, %v896
      %v928 = vadd.f32 %v861, %v897
      %v929 = vadd.f32 %v862, %v897
      %v930 = vlaneseq
      %v931 = vshrl.u32 %v930, 7
      %v932 = vsub.s32 2, %v931
      %v933 = vrot.slane %v554, %v932
      %v934 = vmul.f32 %v454, %v933
      %v935 = vmul.f32 %v537, %v933
      %v936 = vmul.f32 %v457, %v933
      %v937 = vmul.f32 %v538, %v933
      %v938 = vmul.f32 %v460, %v933
      %v939 = vmul.f32 %v539, %v933
      %v940 = vmul.f32 %v463, %v933
      %v941 = vmul.f32 %v540, %v933
      %v942 = vmul.f32 %v466, %v933
      %v943 = vmul.f32 %v541, %v933
      %v944 = vmul.f32 %v469, %v933
      %v945 = vmul.f32 %v542, %v933
      %v946 = vmul.f32 %v472, %v933
      %v947 = vmul.f32 %v543, %v933
      %v948 = vmul.f32 %v475, %v933
      %v949 = vmul.f32 %v544, %v933
      %v950 = vmul.f32 %v478, %v933
      %v951 = vmul.f32 %v545, %v933
      %v952 = vmul.f32 %v481, %v933
      %v953 = vmul.f32 %v546, %v933
      %v954 = vmul.f32 %v484, %v933
      %v955 = vmul.f32 %v547, %v933
      %v956 = vmul.f32 %v487, %v933
      %v957 = vmul.f32 %v548, %v933
      %v958 = vmul.f32 %v490, %v933
      %v959 = vmul.f32 %v549, %v933
      %v960 = vmul.f32 %v493, %v933
      %v961 = vmul.f32 %v550, %v933
      %v962 = vmul.f32 %v496, %v933
      %v963 = vmul.f32 %v551, %v933
      %v964 = vmul.f32 %v499, %v933
      %v965 = vmul.f32 %v552, %v933
      %v966 = vadd.f32 %v898, %v934
      %v967 = vadd.f32 %v899, %v935
      %v968 = vadd.f32 %v900, %v936
      %v969 = vadd.f32 %v901, %v937
      %v970 = vadd.f32 %v902, %v938
      %v971 = vadd.f32 %v903, %v939
      %v972 = vadd.f32 %v904, %v940
      %v973 = vadd.f32 %v905, %v941
      %v974 = vadd.f32 %v906, %v942
      %v975 = vadd.f32 %v907, %v943
      %v976 = vadd.f32 %v908, %v944
      %v977 = vadd.f32 %v909, %v945
      %v978 = vadd.f32 %v910, %v946
      %v979 = vadd.f32 %v911, %v947
      %v980 = vadd.f32 %v912, %v948
      %v981 = vadd.f32 %v913, %v949
      %v982 = vadd.f32 %v914, %v950
      %v983 = vadd.f32 %v915, %v951
      %v984 = vadd.f32 %v916, %v952
      %v985 = vadd.f32 %v917, %v953
      %v986 = vadd.f32 %v918, %v954
      %v987 = vadd.f32 %v919, %v955
      %v988 = vadd.f32 %v920, %v956
      %v989 = vadd.f32 %v921, %v957
      %v990 = vadd.f32 %v922, %v958
      %v991 = vadd.f32 %v923, %v959
      %v992 = vadd.f32 %v924, %v960
      %v993 = vadd.f32 %v925, %v961
      %v994 = vadd.f32 %v926, %v962
      %v995 = vadd.f32 %v927, %v963
      %v996 = vadd.f32 %v928, %v964
      %v997 = vadd.f32 %v929, %v965
      %v998 = vlaneseq
      %v999 = vshrl.u32 %v998, 7
      %v1000 = vsub.s32 5, %v999
      %v1001 = vrot.slane %v554, %v1000
      %v1002 = vmul.f32 %v457, %v1001
      %v1003 = vmul.f32 %v538, %v1001
      %v1004 = vmul.f32 %v460, %v1001
      %v1005 = vmul.f32 %v539, %v1001
      %v1006 = vmul.f32 %v463, %v1001
      %v1007 = vmul.f32 %v540, %v1001
      %v1008 = vmul.f32 %v466, %v1001
      %v1009 = vmul.f32 %v541, %v1001
      %v1010 = vmul.f32 %v469, %v1001
      %v1011 = vmul.f32 %v542, %v1001
      %v1012 = vmul.f32 %v472, %v1001
      %v1013 = vmul.f32 %v543, %v1001
      %v1014 = vmul.f32 %v475, %v1001
      %v1015 = vmul.f32 %v544, %v1001
      %v1016 = vmul.f32 %v478, %v1001
      %v1017 = vmul.f32 %v545, %v1001
      %v1018 = vmul.f32 %v481, %v1001
      %v1019 = vmul.f32 %v546, %v1001
      %v1020 = vmul.f32 %v484, %v1001
      %v1021 = vmul.f32 %v547, %v1001
      %v1022 = vmul.f32 %v487, %v1001
      %v1023 = vmul.f32 %v548, %v1001
      %v1024 = vmul.f32 %v490, %v1001
      %v1025 = vmul.f32 %v549, %v1001
      %v1026 = vmul.f32 %v493, %v1001
      %v1027 = vmul.f32 %v550, %v1001
      %v1028 = vmul.f32 %v496, %v1001
      %v1029 = vmul.f32 %v551, %v1001
      %v1030 = vmul.f32 %v499, %v1001
      %v1031 = vmul.f32 %v552, %v1001
      %v1032 = vmul.f32 %v502, %v1001
      %v1033 = vmul.f32 %v553, %v1001
      %v1034 = vadd.f32 %v966, %v1002
      %v1035 = vadd.f32 %v967, %v1003
      %v1036 = vadd.f32 %v968, %v1004
      %v1037 = vadd.f32 %v969, %v1005
      %v1038 = vadd.f32 %v970, %v1006
      %v1039 = vadd.f32 %v971, %v1007
      %v1040 = vadd.f32 %v972, %v1008
      %v1041 = vadd.f32 %v973, %v1009
      %v1042 = vadd.f32 %v974, %v1010
      %v1043 = vadd.f32 %v975, %v1011
      %v1044 = vadd.f32 %v976, %v1012
      %v1045 = vadd.f32 %v977, %v1013
      %v1046 = vadd.f32 %v978, %v1014
      %v1047 = vadd.f32 %v979, %v1015
      %v1048 = vadd.f32 %v980, %v1016
      %v1049 = vadd.f32 %v981, %v1017
      %v1050 = vadd.f32 %v982, %v1018
      %v1051 = vadd.f32 %v983, %v1019
      %v1052 = vadd.f32 %v984, %v1020
      %v1053 = vadd.f32 %v985, %v1021
      %v1054 = vadd.f32 %v986, %v1022
      %v1055 = vadd.f32 %v987, %v1023
      %v1056 = vadd.f32 %v988, %v1024
      %v1057 = vadd.f32 %v989, %v1025
      %v1058 = vadd.f32 %v990, %v1026
      %v1059 = vadd.f32 %v991, %v1027
      %v1060 = vadd.f32 %v992, %v1028
      %v1061 = vadd.f32 %v993, %v1029
      %v1062 = vadd.f32 %v994, %v1030
      %v1063 = vadd.f32 %v995, %v1031
      %v1064 = vadd.f32 %v996, %v1032
      %v1065 = vadd.f32 %v997, %v1033
      %v1066 = vlaneseq
      %v1067 = vshrl.u32 %v1066, 7
      %v1068 = vsub.s32 0, %v1067
      %v1069 = vrot.slane %v555, %v1068
      %v1070 = vmul.f32 %v460, %v1069
      %v1071 = vmul.f32 %v539, %v1069
      %v1072 = vmul.f32 %v463, %v1069
      %v1073 = vmul.f32 %v540, %v1069
      %v1074 = vmul.f32 %v466, %v1069
      %v1075 = vmul.f32 %v541, %v1069
      %v1076 = vmul.f32 %v469, %v1069
      %v1077 = vmul.f32 %v542, %v1069
      %v1078 = vmul.f32 %v472, %v1069
      %v1079 = vmul.f32 %v543, %v1069
      %v1080 = vmul.f32 %v475, %v1069
      %v1081 = vmul.f32 %v544, %v1069
      %v1082 = vmul.f32 %v478, %v1069
      %v1083 = vmul.f32 %v545, %v1069
      %v1084 = vmul.f32 %v481, %v1069
      %v1085 = vmul.f32 %v546, %v1069
      %v1086 = vmul.f32 %v484, %v1069
      %v1087 = vmul.f32 %v547, %v1069
      %v1088 = vmul.f32 %v487, %v1069
      %v1089 = vmul.f32 %v548, %v1069
      %v1090 = vmul.f32 %v490, %v1069
      %v1091 = vmul.f32 %v549, %v1069
      %v1092 = vmul.f32 %v493, %v1069
      %v1093 = vmul.f32 %v550, %v1069
      %v1094 = vmul.f32 %v496, %v1069
      %v1095 = vmul.f32 %v551, %v1069
      %v1096 = vmul.f32 %v499, %v1069
      %v1097 = vmul.f32 %v552, %v1069
      %v1098 = vmul.f32 %v502, %v1069
      %v1099 = vmul.f32 %v553, %v1069
      %v1100 = vmul.f32 %v454, %v1069
      %v1101 = vmul.f32 %v537, %v1069
      %v1102 = vadd.f32 %v1034, %v1070
      %v1103 = vadd.f32 %v1035, %v1071
      %v1104 = vadd.f32 %v1036, %v1072
      %v1105 = vadd.f32 %v1037, %v1073
      %v1106 = vadd.f32 %v1038, %v1074
      %v1107 = vadd.f32 %v1039, %v1075
      %v1108 = vadd.f32 %v1040, %v1076
      %v1109 = vadd.f32 %v1041, %v1077
      %v1110 = vadd.f32 %v1042, %v1078
      %v1111 = vadd.f32 %v1043, %v1079
      %v1112 = vadd.f32 %v1044, %v1080
      %v1113 = vadd.f32 %v1045, %v1081
      %v1114 = vadd.f32 %v1046, %v1082
      %v1115 = vadd.f32 %v1047, %v1083
      %v1116 = vadd.f32 %v1048, %v1084
      %v1117 = vadd.f32 %v1049, %v1085
      %v1118 = vadd.f32 %v1050, %v1086
      %v1119 = vadd.f32 %v1051, %v1087
      %v1120 = vadd.f32 %v1052, %v1088
      %v1121 = vadd.f32 %v1053, %v1089
      %v1122 = vadd.f32 %v1054, %v1090
      %v1123 = vadd.f32 %v1055, %v1091
      %v1124 = vadd.f32 %v1056, %v1092
      %v1125 = vadd.f32 %v1057, %v1093
      %v1126 = vadd.f32 %v1058, %v1094
      %v1127 = vadd.f32 %v1059, %v1095
      %v1128 = vadd.f32 %v1060, %v1096
      %v1129 = vadd.f32 %v1061, %v1097
      %v1130 = vadd.f32 %v1062, %v1098
      %v1131 = vadd.f32 %v1063, %v1099
      %v1132 = vadd.f32 %v1064, %v1100
      %v1133 = vadd.f32 %v1065, %v1101
      %v1134 = vpack.c.bf16 %v1103, %v1102
      %v1135 = vpack.c.bf16 %v1105, %v1104
      %v1136 = vpack.c.bf16 %v1107, %v1106
      %v1137 = vpack.c.bf16 %v1109, %v1108
      %v1138 = vpack.c.bf16 %v1111, %v1110
      %v1139 = vpack.c.bf16 %v1113, %v1112
      %v1140 = vpack.c.bf16 %v1115, %v1114
      %v1141 = vpack.c.bf16 %v1117, %v1116
      %v1142 = vpack.c.bf16 %v1119, %v1118
      %v1143 = vpack.c.bf16 %v1121, %v1120
      %v1144 = vpack.c.bf16 %v1123, %v1122
      %v1145 = vpack.c.bf16 %v1125, %v1124
      %v1146 = vpack.c.bf16 %v1127, %v1126
      %v1147 = vpack.c.bf16 %v1129, %v1128
      %v1148 = vpack.c.bf16 %v1131, %v1130
      %v1149 = vpack.c.bf16 %v1133, %v1132
      %v1150 = vld [vmem:[%s2] sm:$0xf]
      %v1151 = vld [vmem:[%s2 + $0x4] sm:$0xf]
      %v1152 = vld [vmem:[%s3] sm:$0x1]
      %v1154 = vlaneseq
      %v1155 = vshrl.u32 %v1154, 7
      %v1156 = vsub.s32 0, %v1155
      %v1157 = vrot.slane %v1152, %v1156
      %v1161 = vunpack.c.l.b16 %v1150
      %v1162 = vunpack.c.l.b16 %v1151
      %v1163 = vpack.c.b16 %v1162, %v1161
      %vm1165 = vcmask 130048
      %v1167 = vsel %vm1165, %v1134, 0
      %v1170 = vsel %vm1165, %v1135, 0
      %v1173 = vsel %vm1165, %v1136, 0
      %v1176 = vsel %vm1165, %v1137, 0
      %v1179 = vsel %vm1165, %v1138, 0
      %v1182 = vsel %vm1165, %v1139, 0
      %v1185 = vsel %vm1165, %v1140, 0
      %v1188 = vsel %vm1165, %v1141, 0
      %v1191 = vsel %vm1165, %v1142, 0
      %v1194 = vsel %vm1165, %v1143, 0
      %v1197 = vsel %vm1165, %v1144, 0
      %v1200 = vsel %vm1165, %v1145, 0
      %v1203 = vsel %vm1165, %v1146, 0
      %v1206 = vsel %vm1165, %v1147, 0
      %v1209 = vsel %vm1165, %v1148, 0
      %v1212 = vsel %vm1165, %v1149, 0
      %1214 = vmatprep.subr.bf16.mxu0 0
      %1215 = vmatpush1.bf16.msra.mxu0 %v1163
      %1216 = vmatprep.subr.bf16.mxu0 0
      %1217 = vmatpush1.bf16.msra.mxu0 0
      %1218 = vmatprep.subr.bf16.mxu0 0
      %1219 = vmatpush1.bf16.msra.mxu0 0
      %1220 = vmatprep.subr.bf16.mxu0 0
      %1221 = vmatpush1.bf16.msra.mxu0 0
      %1222 = vmatprep.subr.bf16.mxu0 0
      %1223 = vmatpush1.bf16.msra.mxu0 0
      %1224 = vmatprep.subr.bf16.mxu0 0
      %1225 = vmatpush1.bf16.msra.mxu0 0
      %1226 = vmatprep.subr.bf16.mxu0 0
      %1227 = vmatpush1.bf16.msra.mxu0 0
      %1228 = vmatprep.subr.bf16.mxu0 0
      %1229 = vmatpush1.bf16.msra.mxu0 0
      %1230 = vmatprep.subr.bf16.mxu0 0
      %1231 = vmatpush1.bf16.msra.mxu0 0
      %1232 = vmatprep.subr.bf16.mxu0 0
      %1233 = vmatpush1.bf16.msra.mxu0 0
      %1234 = vmatprep.subr.bf16.mxu0 0
      %1235 = vmatpush1.bf16.msra.mxu0 0
      %1236 = vmatprep.subr.bf16.mxu0 0
      %1237 = vmatpush1.bf16.msra.mxu0 0
      %1238 = vmatprep.subr.bf16.mxu0 0
      %1239 = vmatpush1.bf16.msra.mxu0 0
      %1240 = vmatprep.subr.bf16.mxu0 0
      %1241 = vmatpush1.bf16.msra.mxu0 0
      %1242 = vmatprep.subr.bf16.mxu0 0
      %1243 = vmatpush1.bf16.msra.mxu0 0
      %1244 = vmatprep.subr.bf16.mxu0 0
      %1245 = vmatpush1.bf16.msra.mxu0 0
      %1246 = vmatprep.mubr.bf16.mxu0 0
      %1247 = vmatmul.mubr.bf16.gmra.mrb[0].mxu0 %v1167
      %v1248 = vpop.f32.mrb[0].mxu0
      %v1249 = vadd.f32 %v1157, %v1248
      %v1250 = vpop.f32.mrb[0].mxu0
      %v1251 = vpop.f32.mrb[0].mxu0
      %v1252 = vadd.f32 %v1157, %v1251
      %v1253 = vpop.f32.mrb[0].mxu0
      %1254 = vmatprep.mubr.bf16.mxu0 0
      %1255 = vmatmul.mubr.bf16.gmra.mrb[0].mxu0 %v1170
      %v1256 = vpop.f32.mrb[0].mxu0
      %v1257 = vadd.f32 %v1157, %v1256
      %v1258 = vpop.f32.mrb[0].mxu0
      %v1259 = vpop.f32.mrb[0].mxu0
      %v1260 = vadd.f32 %v1157, %v1259
      %v1261 = vpop.f32.mrb[0].mxu0
      %1262 = vmatprep.mubr.bf16.mxu0 0
      %1263 = vmatmul.mubr.bf16.gmra.mrb[0].mxu0 %v1173
      %v1264 = vpop.f32.mrb[0].mxu0
      %v1265 = vadd.f32 %v1157, %v1264
      %v1266 = vpop.f32.mrb[0].mxu0
      %v1267 = vpop.f32.mrb[0].mxu0
      %v1268 = vadd.f32 %v1157, %v1267
      %v1269 = vpop.f32.mrb[0].mxu0
      %1270 = vmatprep.mubr.bf16.mxu0 0
      %1271 = vmatmul.mubr.bf16.gmra.mrb[0].mxu0 %v1176
      %v1272 = vpop.f32.mrb[0].mxu0
      %v1273 = vadd.f32 %v1157, %v1272
      %v1274 = vpop.f32.mrb[0].mxu0
      %v1275 = vpop.f32.mrb[0].mxu0
      %v1276 = vadd.f32 %v1157, %v1275
      %v1277 = vpop.f32.mrb[0].mxu0
      %1278 = vmatprep.mubr.bf16.mxu0 0
      %1279 = vmatmul.mubr.bf16.gmra.mrb[0].mxu0 %v1179
      %v1280 = vpop.f32.mrb[0].mxu0
      %v1281 = vadd.f32 %v1157, %v1280
      %v1282 = vpop.f32.mrb[0].mxu0
      %v1283 = vpop.f32.mrb[0].mxu0
      %v1284 = vadd.f32 %v1157, %v1283
      %v1285 = vpop.f32.mrb[0].mxu0
      %1286 = vmatprep.mubr.bf16.mxu0 0
      %1287 = vmatmul.mubr.bf16.gmra.mrb[0].mxu0 %v1182
      %v1288 = vpop.f32.mrb[0].mxu0
      %v1289 = vadd.f32 %v1157, %v1288
      %v1290 = vpop.f32.mrb[0].mxu0
      %v1291 = vpop.f32.mrb[0].mxu0
      %v1292 = vadd.f32 %v1157, %v1291
      %v1293 = vpop.f32.mrb[0].mxu0
      %1294 = vmatprep.mubr.bf16.mxu0 0
      %1295 = vmatmul.mubr.bf16.gmra.mrb[0].mxu0 %v1185
      %v1296 = vpop.f32.mrb[0].mxu0
      %v1297 = vadd.f32 %v1157, %v1296
      %v1298 = vpop.f32.mrb[0].mxu0
      %v1299 = vpop.f32.mrb[0].mxu0
      %v1300 = vadd.f32 %v1157, %v1299
      %v1301 = vpop.f32.mrb[0].mxu0
      %1302 = vmatprep.mubr.bf16.mxu0 0
      %1303 = vmatmul.mubr.bf16.gmra.mrb[0].mxu0 %v1188
      %v1304 = vpop.f32.mrb[0].mxu0
      %v1305 = vadd.f32 %v1157, %v1304
      %v1306 = vpop.f32.mrb[0].mxu0
      %v1307 = vpop.f32.mrb[0].mxu0
      %v1308 = vadd.f32 %v1157, %v1307
      %v1309 = vpop.f32.mrb[0].mxu0
      %1310 = vmatprep.mubr.bf16.mxu0 0
      %1311 = vmatmul.mubr.bf16.gmra.mrb[0].mxu0 %v1191
      %v1312 = vpop.f32.mrb[0].mxu0
      %v1313 = vadd.f32 %v1157, %v1312
      %v1314 = vpop.f32.mrb[0].mxu0
      %v1315 = vpop.f32.mrb[0].mxu0
      %v1316 = vadd.f32 %v1157, %v1315
      %v1317 = vpop.f32.mrb[0].mxu0
      %1318 = vmatprep.mubr.bf16.mxu0 0
      %1319 = vmatmul.mubr.bf16.gmra.mrb[0].mxu0 %v1194
      %v1320 = vpop.f32.mrb[0].mxu0
      %v1321 = vadd.f32 %v1157, %v1320
      %v1322 = vpop.f32.mrb[0].mxu0
      %v1323 = vpop.f32.mrb[0].mxu0
      %v1324 = vadd.f32 %v1157, %v1323
      %v1325 = vpop.f32.mrb[0].mxu0
      %1326 = vmatprep.mubr.bf16.mxu0 0
      %1327 = vmatmul.mubr.bf16.gmra.mrb[0].mxu0 %v1197
      %v1328 = vpop.f32.mrb[0].mxu0
      %v1329 = vadd.f32 %v1157, %v1328
      %v1330 = vpop.f32.mrb[0].mxu0
      %v1331 = vpop.f32.mrb[0].mxu0
      %v1332 = vadd.f32 %v1157, %v1331
      %v1333 = vpop.f32.mrb[0].mxu0
      %1334 = vmatprep.mubr.bf16.mxu0 0
      %1335 = vmatmul.mubr.bf16.gmra.mrb[0].mxu0 %v1200
      %v1336 = vpop.f32.mrb[0].mxu0
      %v1337 = vadd.f32 %v1157, %v1336
      %v1338 = vpop.f32.mrb[0].mxu0
      %v1339 = vpop.f32.mrb[0].mxu0
      %v1340 = vadd.f32 %v1157, %v1339
      %v1341 = vpop.f32.mrb[0].mxu0
      %1342 = vmatprep.mubr.bf16.mxu0 0
      %1343 = vmatmul.mubr.bf16.gmra.mrb[0].mxu0 %v1203
      %v1344 = vpop.f32.mrb[0].mxu0
      %v1345 = vadd.f32 %v1157, %v1344
      %v1346 = vpop.f32.mrb[0].mxu0
      %v1347 = vpop.f32.mrb[0].mxu0
      %v1348 = vadd.f32 %v1157, %v1347
      %v1349 = vpop.f32.mrb[0].mxu0
      %1350 = vmatprep.mubr.bf16.mxu0 0
      %1351 = vmatmul.mubr.bf16.gmra.mrb[0].mxu0 %v1206
      %v1352 = vpop.f32.mrb[0].mxu0
      %v1353 = vadd.f32 %v1157, %v1352
      %v1354 = vpop.f32.mrb[0].mxu0
      %v1355 = vpop.f32.mrb[0].mxu0
      %v1356 = vadd.f32 %v1157, %v1355
      %v1357 = vpop.f32.mrb[0].mxu0
      %1358 = vmatprep.mubr.bf16.mxu0 0
      %1359 = vmatmul.mubr.bf16.gmra.mrb[0].mxu0 %v1209
      %v1360 = vpop.f32.mrb[0].mxu0
      %v1361 = vadd.f32 %v1157, %v1360
      %v1362 = vpop.f32.mrb[0].mxu0
      %v1363 = vpop.f32.mrb[0].mxu0
      %v1364 = vadd.f32 %v1157, %v1363
      %v1365 = vpop.f32.mrb[0].mxu0
      %1366 = vmatprep.mubr.bf16.mxu0 0
      %1367 = vmatmul.mubr.bf16.gmra.mrb[0].mxu0 %v1212
      %v1368 = vpop.f32.mrb[0].mxu0
      %v1369 = vadd.f32 %v1157, %v1368
      %v1370 = vpop.f32.mrb[0].mxu0
      %v1371 = vpop.f32.mrb[0].mxu0
      %v1372 = vadd.f32 %v1157, %v1371
      %v1373 = vpop.f32.mrb[0].mxu0
      %1374 = vdwg.mxu0
      %v1375 = vmul.f32 %v1249, 0.5
      %v1376 = vmul.f32 %v1252, 0.5
      %v1377 = vmul.f32 %v1257, 0.5
      %v1378 = vmul.f32 %v1260, 0.5
      %v1379 = vmul.f32 %v1265, 0.5
      %v1380 = vmul.f32 %v1268, 0.5
      %v1381 = vmul.f32 %v1273, 0.5
      %v1382 = vmul.f32 %v1276, 0.5
      %v1383 = vmul.f32 %v1281, 0.5
      %v1384 = vmul.f32 %v1284, 0.5
      %v1385 = vmul.f32 %v1289, 0.5
      %v1386 = vmul.f32 %v1292, 0.5
      %v1387 = vmul.f32 %v1297, 0.5
      %v1388 = vmul.f32 %v1300, 0.5
      %v1389 = vmul.f32 %v1305, 0.5
      %v1390 = vmul.f32 %v1308, 0.5
      %v1391 = vmul.f32 %v1313, 0.5
      %v1392 = vmul.f32 %v1316, 0.5
      %v1393 = vmul.f32 %v1321, 0.5
      %v1394 = vmul.f32 %v1324, 0.5
      %v1395 = vmul.f32 %v1329, 0.5
      %v1396 = vmul.f32 %v1332, 0.5
      %v1397 = vmul.f32 %v1337, 0.5
      %v1398 = vmul.f32 %v1340, 0.5
      %v1399 = vmul.f32 %v1345, 0.5
      %v1400 = vmul.f32 %v1348, 0.5
      %v1401 = vmul.f32 %v1353, 0.5
      %v1402 = vmul.f32 %v1356, 0.5
      %v1403 = vmul.f32 %v1361, 0.5
      %v1404 = vmul.f32 %v1364, 0.5
      %v1405 = vmul.f32 %v1369, 0.5
      %v1406 = vmul.f32 %v1372, 0.5
      %v1407 = vmul.f32 %v1249, 0.70710677
      %v1408 = vmul.f32 %v1252, 0.70710677
      %v1409 = vmul.f32 %v1257, 0.70710677
      %v1410 = vmul.f32 %v1260, 0.70710677
      %v1411 = vmul.f32 %v1265, 0.70710677
      %v1412 = vmul.f32 %v1268, 0.70710677
      %v1413 = vmul.f32 %v1273, 0.70710677
      %v1414 = vmul.f32 %v1276, 0.70710677
      %v1415 = vmul.f32 %v1281, 0.70710677
      %v1416 = vmul.f32 %v1284, 0.70710677
      %v1417 = vmul.f32 %v1289, 0.70710677
      %v1418 = vmul.f32 %v1292, 0.70710677
      %v1419 = vmul.f32 %v1297, 0.70710677
      %v1420 = vmul.f32 %v1300, 0.70710677
      %v1421 = vmul.f32 %v1305, 0.70710677
      %v1422 = vmul.f32 %v1308, 0.70710677
      %v1423 = vmul.f32 %v1313, 0.70710677
      %v1424 = vmul.f32 %v1316, 0.70710677
      %v1425 = vmul.f32 %v1321, 0.70710677
      %v1426 = vmul.f32 %v1324, 0.70710677
      %v1427 = vmul.f32 %v1329, 0.70710677
      %v1428 = vmul.f32 %v1332, 0.70710677
      %v1429 = vmul.f32 %v1337, 0.70710677
      %v1430 = vmul.f32 %v1340, 0.70710677
      %v1431 = vmul.f32 %v1345, 0.70710677
      %v1432 = vmul.f32 %v1348, 0.70710677
      %v1433 = vmul.f32 %v1353, 0.70710677
      %v1434 = vmul.f32 %v1356, 0.70710677
      %v1435 = vmul.f32 %v1361, 0.70710677
      %v1436 = vmul.f32 %v1364, 0.70710677
      %v1437 = vmul.f32 %v1369, 0.70710677
      %v1438 = vmul.f32 %v1372, 0.70710677
      %v1439 = verf.f32.pop %v1407
      %v1440 = verf.f32.pop %v1408
      %v1441 = verf.f32.pop %v1409
      %v1442 = verf.f32.pop %v1410
      %v1443 = verf.f32.pop %v1411
      %v1444 = verf.f32.pop %v1412
      %v1445 = verf.f32.pop %v1413
      %v1446 = verf.f32.pop %v1414
      %v1447 = verf.f32.pop %v1415
      %v1448 = verf.f32.pop %v1416
      %v1449 = verf.f32.pop %v1417
      %v1450 = verf.f32.pop %v1418
      %v1451 = verf.f32.pop %v1419
      %v1452 = verf.f32.pop %v1420
      %v1453 = verf.f32.pop %v1421
      %v1454 = verf.f32.pop %v1422
      %v1455 = verf.f32.pop %v1423
      %v1456 = verf.f32.pop %v1424
      %v1457 = verf.f32.pop %v1425
      %v1458 = verf.f32.pop %v1426
      %v1459 = verf.f32.pop %v1427
      %v1460 = verf.f32.pop %v1428
      %v1461 = verf.f32.pop %v1429
      %v1462 = verf.f32.pop %v1430
      %v1463 = verf.f32.pop %v1431
      %v1464 = verf.f32.pop %v1432
      %v1465 = verf.f32.pop %v1433
      %v1466 = verf.f32.pop %v1434
      %v1467 = verf.f32.pop %v1435
      %v1468 = verf.f32.pop %v1436
      %v1469 = verf.f32.pop %v1437
      %v1470 = verf.f32.pop %v1438
      %v1471 = vadd.f32 %v1439, 1.0
      %v1472 = vadd.f32 %v1440, 1.0
      %v1473 = vadd.f32 %v1441, 1.0
      %v1474 = vadd.f32 %v1442, 1.0
      %v1475 = vadd.f32 %v1443, 1.0
      %v1476 = vadd.f32 %v1444, 1.0
      %v1477 = vadd.f32 %v1445, 1.0
      %v1478 = vadd.f32 %v1446, 1.0
      %v1479 = vadd.f32 %v1447, 1.0
      %v1480 = vadd.f32 %v1448, 1.0
      %v1481 = vadd.f32 %v1449, 1.0
      %v1482 = vadd.f32 %v1450, 1.0
      %v1483 = vadd.f32 %v1451, 1.0
      %v1484 = vadd.f32 %v1452, 1.0
      %v1485 = vadd.f32 %v1453, 1.0
      %v1486 = vadd.f32 %v1454, 1.0
      %v1487 = vadd.f32 %v1455, 1.0
      %v1488 = vadd.f32 %v1456, 1.0
      %v1489 = vadd.f32 %v1457, 1.0
      %v1490 = vadd.f32 %v1458, 1.0
      %v1491 = vadd.f32 %v1459, 1.0
      %v1492 = vadd.f32 %v1460, 1.0
      %v1493 = vadd.f32 %v1461, 1.0
      %v1494 = vadd.f32 %v1462, 1.0
      %v1495 = vadd.f32 %v1463, 1.0
      %v1496 = vadd.f32 %v1464, 1.0
      %v1497 = vadd.f32 %v1465, 1.0
      %v1498 = vadd.f32 %v1466, 1.0
      %v1499 = vadd.f32 %v1467, 1.0
      %v1500 = vadd.f32 %v1468, 1.0
      %v1501 = vadd.f32 %v1469, 1.0
      %v1502 = vadd.f32 %v1470, 1.0
      %v1503 = vmul.f32 %v1375, %v1471
      %v1504 = vmul.f32 %v1376, %v1472
      %v1505 = vmul.f32 %v1377, %v1473
      %v1506 = vmul.f32 %v1378, %v1474
      %v1507 = vmul.f32 %v1379, %v1475
      %v1508 = vmul.f32 %v1380, %v1476
      %v1509 = vmul.f32 %v1381, %v1477
      %v1510 = vmul.f32 %v1382, %v1478
      %v1511 = vmul.f32 %v1383, %v1479
      %v1512 = vmul.f32 %v1384, %v1480
      %v1513 = vmul.f32 %v1385, %v1481
      %v1514 = vmul.f32 %v1386, %v1482
      %v1515 = vmul.f32 %v1387, %v1483
      %v1516 = vmul.f32 %v1388, %v1484
      %v1517 = vmul.f32 %v1389, %v1485
      %v1518 = vmul.f32 %v1390, %v1486
      %v1519 = vmul.f32 %v1391, %v1487
      %v1520 = vmul.f32 %v1392, %v1488
      %v1521 = vmul.f32 %v1393, %v1489
      %v1522 = vmul.f32 %v1394, %v1490
      %v1523 = vmul.f32 %v1395, %v1491
      %v1524 = vmul.f32 %v1396, %v1492
      %v1525 = vmul.f32 %v1397, %v1493
      %v1526 = vmul.f32 %v1398, %v1494
      %v1527 = vmul.f32 %v1399, %v1495
      %v1528 = vmul.f32 %v1400, %v1496
      %v1529 = vmul.f32 %v1401, %v1497
      %v1530 = vmul.f32 %v1402, %v1498
      %v1531 = vmul.f32 %v1403, %v1499
      %v1532 = vmul.f32 %v1404, %v1500
      %v1533 = vmul.f32 %v1405, %v1501
      %v1534 = vmul.f32 %v1406, %v1502
      %v1535 = vpack.c.bf16 %v1504, %v1503
      %v1536 = vpack.c.bf16 %v1506, %v1505
      %v1537 = vpack.c.bf16 %v1508, %v1507
      %v1538 = vpack.c.bf16 %v1510, %v1509
      %v1539 = vpack.c.bf16 %v1512, %v1511
      %v1540 = vpack.c.bf16 %v1514, %v1513
      %v1541 = vpack.c.bf16 %v1516, %v1515
      %v1542 = vpack.c.bf16 %v1518, %v1517
      %v1543 = vpack.c.bf16 %v1520, %v1519
      %v1544 = vpack.c.bf16 %v1522, %v1521
      %v1545 = vpack.c.bf16 %v1524, %v1523
      %v1546 = vpack.c.bf16 %v1526, %v1525
      %v1547 = vpack.c.bf16 %v1528, %v1527
      %v1548 = vpack.c.bf16 %v1530, %v1529
      %v1549 = vpack.c.bf16 %v1532, %v1531
      %v1550 = vpack.c.bf16 %v1534, %v1533
      %v1551 = vld [vmem:[%s4] sm:$0xf]
      %v1552 = vld [vmem:[%s4 + $0x4] sm:$0xf]
      %v1553 = vld [vmem:[%s4 + $0x8] sm:$0xf]
      %v1554 = vld [vmem:[%s4 + $0xc] sm:$0xf]
      %v1555 = vld [vmem:[%s4 + $0x10] sm:$0xf]
      %v1556 = vld [vmem:[%s4 + $0x14] sm:$0xf]
      %v1557 = vld [vmem:[%s4 + $0x18] sm:$0xf]
      %v1558 = vld [vmem:[%s4 + $0x1c] sm:$0xf]
      %v1559 = vld [vmem:[%s5] sm:$0x1]
      %v1561 = vlaneseq
      %v1562 = vshrl.u32 %v1561, 7
      %v1563 = vsub.s32 0, %v1562
      %v1564 = vrot.slane %v1559, %v1563
      %v1574 = vunpack.c.l.b16 %v1551
      %v1575 = vunpack.c.l.b16 %v1552
      %v1576 = vunpack.c.l.b16 %v1553
      %v1577 = vunpack.c.l.b16 %v1554
      %v1578 = vunpack.c.l.b16 %v1555
      %v1579 = vunpack.c.l.b16 %v1556
      %v1580 = vunpack.c.l.b16 %v1557
      %v1581 = vunpack.c.l.b16 %v1558
      %v1582 = vpack.c.b16 %v1575, %v1574
      %v1583 = vpack.c.b16 %v1577, %v1576
      %v1584 = vpack.c.b16 %v1579, %v1578
      %v1585 = vpack.c.b16 %v1581, %v1580
      %vm1590 = vcmask 523264
      %v1592 = vsel %vm1590, %v1535, 0
      %v1595 = vsel %vm1590, %v1536, 0
      %v1598 = vsel %vm1590, %v1537, 0
      %v1601 = vsel %vm1590, %v1538, 0
      %v1604 = vsel %vm1590, %v1539, 0
      %v1607 = vsel %vm1590, %v1540, 0
      %v1610 = vsel %vm1590, %v1541, 0
      %v1613 = vsel %vm1590, %v1542, 0
      %v1616 = vsel %vm1590, %v1543, 0
      %v1619 = vsel %vm1590, %v1544, 0
      %v1622 = vsel %vm1590, %v1545, 0
      %v1625 = vsel %vm1590, %v1546, 0
      %v1628 = vsel %vm1590, %v1547, 0
      %v1631 = vsel %vm1590, %v1548, 0
      %v1634 = vsel %vm1590, %v1549, 0
      %v1637 = vsel %vm1590, %v1550, 0
      %1639 = vmatprep.subr.bf16.mxu0 0
      %1640 = vmatpush1.bf16.msra.mxu0 %v1582
      %1641 = vmatprep.subr.bf16.mxu0 0
      %1642 = vmatpush1.bf16.msra.mxu0 %v1583
      %1643 = vmatprep.subr.bf16.mxu0 0
      %1644 = vmatpush1.bf16.msra.mxu0 %v1584
      %1645 = vmatprep.subr.bf16.mxu0 0
      %1646 = vmatpush1.bf16.msra.mxu0 %v1585
      %1647 = vmatprep.subr.bf16.mxu0 0
      %1648 = vmatpush1.bf16.msra.mxu0 0
      %1649 = vmatprep.subr.bf16.mxu0 0
      %1650 = vmatpush1.bf16.msra.mxu0 0
      %1651 = vmatprep.subr.bf16.mxu0 0
      %1652 = vmatpush1.bf16.msra.mxu0 0
      %1653 = vmatprep.subr.bf16.mxu0 0
      %1654 = vmatpush1.bf16.msra.mxu0 0
      %1655 = vmatprep.subr.bf16.mxu0 0
      %1656 = vmatpush1.bf16.msra.mxu0 0
      %1657 = vmatprep.subr.bf16.mxu0 0
      %1658 = vmatpush1.bf16.msra.mxu0 0
      %1659 = vmatprep.subr.bf16.mxu0 0
      %1660 = vmatpush1.bf16.msra.mxu0 0
      %1661 = vmatprep.subr.bf16.mxu0 0
      %1662 = vmatpush1.bf16.msra.mxu0 0
      %1663 = vmatprep.subr.bf16.mxu0 0
      %1664 = vmatpush1.bf16.msra.mxu0 0
      %1665 = vmatprep.subr.bf16.mxu0 0
      %1666 = vmatpush1.bf16.msra.mxu0 0
      %1667 = vmatprep.subr.bf16.mxu0 0
      %1668 = vmatpush1.bf16.msra.mxu0 0
      %1669 = vmatprep.subr.bf16.mxu0 0
      %1670 = vmatpush1.bf16.msra.mxu0 0
      %1671 = vmatprep.mubr.bf16.mxu0 0
      %1672 = vmatmul.mubr.bf16.gmra.mrb[0].mxu0 %v1592
      %v1673 = vpop.f32.mrb[0].mxu0
      %v1674 = vadd.f32 %v1564, %v1673
      %v1675 = vpop.f32.mrb[0].mxu0
      %v1676 = vpop.f32.mrb[0].mxu0
      %v1677 = vadd.f32 %v1564, %v1676
      %v1678 = vpop.f32.mrb[0].mxu0
      %1679 = vmatprep.mubr.bf16.mxu0 0
      %1680 = vmatmul.mubr.bf16.gmra.mrb[0].mxu0 %v1595
      %v1681 = vpop.f32.mrb[0].mxu0
      %v1682 = vadd.f32 %v1564, %v1681
      %v1683 = vpop.f32.mrb[0].mxu0
      %v1684 = vpop.f32.mrb[0].mxu0
      %v1685 = vadd.f32 %v1564, %v1684
      %v1686 = vpop.f32.mrb[0].mxu0
      %1687 = vmatprep.mubr.bf16.mxu0 0
      %1688 = vmatmul.mubr.bf16.gmra.mrb[0].mxu0 %v1598
      %v1689 = vpop.f32.mrb[0].mxu0
      %v1690 = vadd.f32 %v1564, %v1689
      %v1691 = vpop.f32.mrb[0].mxu0
      %v1692 = vpop.f32.mrb[0].mxu0
      %v1693 = vadd.f32 %v1564, %v1692
      %v1694 = vpop.f32.mrb[0].mxu0
      %1695 = vmatprep.mubr.bf16.mxu0 0
      %1696 = vmatmul.mubr.bf16.gmra.mrb[0].mxu0 %v1601
      %v1697 = vpop.f32.mrb[0].mxu0
      %v1698 = vadd.f32 %v1564, %v1697
      %v1699 = vpop.f32.mrb[0].mxu0
      %v1700 = vpop.f32.mrb[0].mxu0
      %v1701 = vadd.f32 %v1564, %v1700
      %v1702 = vpop.f32.mrb[0].mxu0
      %1703 = vmatprep.mubr.bf16.mxu0 0
      %1704 = vmatmul.mubr.bf16.gmra.mrb[0].mxu0 %v1604
      %v1705 = vpop.f32.mrb[0].mxu0
      %v1706 = vadd.f32 %v1564, %v1705
      %v1707 = vpop.f32.mrb[0].mxu0
      %v1708 = vpop.f32.mrb[0].mxu0
      %v1709 = vadd.f32 %v1564, %v1708
      %v1710 = vpop.f32.mrb[0].mxu0
      %1711 = vmatprep.mubr.bf16.mxu0 0
      %1712 = vmatmul.mubr.bf16.gmra.mrb[0].mxu0 %v1607
      %v1713 = vpop.f32.mrb[0].mxu0
      %v1714 = vadd.f32 %v1564, %v1713
      %v1715 = vpop.f32.mrb[0].mxu0
      %v1716 = vpop.f32.mrb[0].mxu0
      %v1717 = vadd.f32 %v1564, %v1716
      %v1718 = vpop.f32.mrb[0].mxu0
      %1719 = vmatprep.mubr.bf16.mxu0 0
      %1720 = vmatmul.mubr.bf16.gmra.mrb[0].mxu0 %v1610
      %v1721 = vpop.f32.mrb[0].mxu0
      %v1722 = vadd.f32 %v1564, %v1721
      %v1723 = vpop.f32.mrb[0].mxu0
      %v1724 = vpop.f32.mrb[0].mxu0
      %v1725 = vadd.f32 %v1564, %v1724
      %v1726 = vpop.f32.mrb[0].mxu0
      %1727 = vmatprep.mubr.bf16.mxu0 0
      %1728 = vmatmul.mubr.bf16.gmra.mrb[0].mxu0 %v1613
      %v1729 = vpop.f32.mrb[0].mxu0
      %v1730 = vadd.f32 %v1564, %v1729
      %v1731 = vpop.f32.mrb[0].mxu0
      %v1732 = vpop.f32.mrb[0].mxu0
      %v1733 = vadd.f32 %v1564, %v1732
      %v1734 = vpop.f32.mrb[0].mxu0
      %1735 = vmatprep.mubr.bf16.mxu0 0
      %1736 = vmatmul.mubr.bf16.gmra.mrb[0].mxu0 %v1616
      %v1737 = vpop.f32.mrb[0].mxu0
      %v1738 = vadd.f32 %v1564, %v1737
      %v1739 = vpop.f32.mrb[0].mxu0
      %v1740 = vpop.f32.mrb[0].mxu0
      %v1741 = vadd.f32 %v1564, %v1740
      %v1742 = vpop.f32.mrb[0].mxu0
      %1743 = vmatprep.mubr.bf16.mxu0 0
      %1744 = vmatmul.mubr.bf16.gmra.mrb[0].mxu0 %v1619
      %v1745 = vpop.f32.mrb[0].mxu0
      %v1746 = vadd.f32 %v1564, %v1745
      %v1747 = vpop.f32.mrb[0].mxu0
      %v1748 = vpop.f32.mrb[0].mxu0
      %v1749 = vadd.f32 %v1564, %v1748
      %v1750 = vpop.f32.mrb[0].mxu0
      %1751 = vmatprep.mubr.bf16.mxu0 0
      %1752 = vmatmul.mubr.bf16.gmra.mrb[0].mxu0 %v1622
      %v1753 = vpop.f32.mrb[0].mxu0
      %v1754 = vadd.f32 %v1564, %v1753
      %v1755 = vpop.f32.mrb[0].mxu0
      %v1756 = vpop.f32.mrb[0].mxu0
      %v1757 = vadd.f32 %v1564, %v1756
      %v1758 = vpop.f32.mrb[0].mxu0
      %1759 = vmatprep.mubr.bf16.mxu0 0
      %1760 = vmatmul.mubr.bf16.gmra.mrb[0].mxu0 %v1625
      %v1761 = vpop.f32.mrb[0].mxu0
      %v1762 = vadd.f32 %v1564, %v1761
      %v1763 = vpop.f32.mrb[0].mxu0
      %v1764 = vpop.f32.mrb[0].mxu0
      %v1765 = vadd.f32 %v1564, %v1764
      %v1766 = vpop.f32.mrb[0].mxu0
      %1767 = vmatprep.mubr.bf16.mxu0 0
      %1768 = vmatmul.mubr.bf16.gmra.mrb[0].mxu0 %v1628
      %v1769 = vpop.f32.mrb[0].mxu0
      %v1770 = vadd.f32 %v1564, %v1769
      %v1771 = vpop.f32.mrb[0].mxu0
      %v1772 = vpop.f32.mrb[0].mxu0
      %v1773 = vadd.f32 %v1564, %v1772
      %v1774 = vpop.f32.mrb[0].mxu0
      %1775 = vmatprep.mubr.bf16.mxu0 0
      %1776 = vmatmul.mubr.bf16.gmra.mrb[0].mxu0 %v1631
      %v1777 = vpop.f32.mrb[0].mxu0
      %v1778 = vadd.f32 %v1564, %v1777
      %v1779 = vpop.f32.mrb[0].mxu0
      %v1780 = vpop.f32.mrb[0].mxu0
      %v1781 = vadd.f32 %v1564, %v1780
      %v1782 = vpop.f32.mrb[0].mxu0
      %1783 = vmatprep.mubr.bf16.mxu0 0
      %1784 = vmatmul.mubr.bf16.gmra.mrb[0].mxu0 %v1634
      %v1785 = vpop.f32.mrb[0].mxu0
      %v1786 = vadd.f32 %v1564, %v1785
      %v1787 = vpop.f32.mrb[0].mxu0
      %v1788 = vpop.f32.mrb[0].mxu0
      %v1789 = vadd.f32 %v1564, %v1788
      %v1790 = vpop.f32.mrb[0].mxu0
      %1791 = vmatprep.mubr.bf16.mxu0 0
      %1792 = vmatmul.mubr.bf16.gmra.mrb[0].mxu0 %v1637
      %v1793 = vpop.f32.mrb[0].mxu0
      %v1794 = vadd.f32 %v1564, %v1793
      %v1795 = vpop.f32.mrb[0].mxu0
      %v1796 = vpop.f32.mrb[0].mxu0
      %v1797 = vadd.f32 %v1564, %v1796
      %v1798 = vpop.f32.mrb[0].mxu0
      %1799 = vdwg.mxu0
      %v1800 = vadd.f32 %v285, %v1674
      %v1801 = vadd.f32 %v286, %v1677
      %v1802 = vadd.f32 %v287, %v1682
      %v1803 = vadd.f32 %v288, %v1685
      %v1804 = vadd.f32 %v289, %v1690
      %v1805 = vadd.f32 %v290, %v1693
      %v1806 = vadd.f32 %v291, %v1698
      %v1807 = vadd.f32 %v292, %v1701
      %v1808 = vadd.f32 %v293, %v1706
      %v1809 = vadd.f32 %v294, %v1709
      %v1810 = vadd.f32 %v295, %v1714
      %v1811 = vadd.f32 %v296, %v1717
      %v1812 = vadd.f32 %v297, %v1722
      %v1813 = vadd.f32 %v298, %v1725
      %v1814 = vadd.f32 %v299, %v1730
      %v1815 = vadd.f32 %v300, %v1733
      %v1816 = vadd.f32 %v301, %v1738
      %v1817 = vadd.f32 %v302, %v1741
      %v1818 = vadd.f32 %v303, %v1746
      %v1819 = vadd.f32 %v304, %v1749
      %v1820 = vadd.f32 %v305, %v1754
      %v1821 = vadd.f32 %v306, %v1757
      %v1822 = vadd.f32 %v307, %v1762
      %v1823 = vadd.f32 %v308, %v1765
      %v1824 = vadd.f32 %v309, %v1770
      %v1825 = vadd.f32 %v310, %v1773
      %v1826 = vadd.f32 %v311, %v1778
      %v1827 = vadd.f32 %v312, %v1781
      %v1828 = vadd.f32 %v313, %v1786
      %v1829 = vadd.f32 %v314, %v1789
      %v1830 = vadd.f32 %v315, %v1794
      %v1831 = vadd.f32 %v316, %v1797
      %v1832 = vpack.c.bf16 %v1801, %v1800
      %v1833 = vpack.c.bf16 %v1803, %v1802
      %v1834 = vpack.c.bf16 %v1805, %v1804
      %v1835 = vpack.c.bf16 %v1807, %v1806
      %v1836 = vpack.c.bf16 %v1809, %v1808
      %v1837 = vpack.c.bf16 %v1811, %v1810
      %v1838 = vpack.c.bf16 %v1813, %v1812
      %v1839 = vpack.c.bf16 %v1815, %v1814
      %v1840 = vpack.c.bf16 %v1817, %v1816
      %v1841 = vpack.c.bf16 %v1819, %v1818
      %v1842 = vpack.c.bf16 %v1821, %v1820
      %v1843 = vpack.c.bf16 %v1823, %v1822
      %v1844 = vpack.c.bf16 %v1825, %v1824
      %v1845 = vpack.c.bf16 %v1827, %v1826
      %v1846 = vpack.c.bf16 %v1829, %v1828
      %v1847 = vpack.c.bf16 %v1831, %v1830
      %v1864 = vunpack.c.l.b16 %v1832
      %v1865 = vunpack.c.h.b16 %v1832
      %v1866 = vunpack.c.l.b16 %v1833
      %v1867 = vunpack.c.h.b16 %v1833
      %v1868 = vunpack.c.l.b16 %v1834
      %v1869 = vunpack.c.h.b16 %v1834
      %v1870 = vunpack.c.l.b16 %v1835
      %v1871 = vunpack.c.h.b16 %v1835
      %v1872 = vunpack.c.l.b16 %v1836
      %v1873 = vunpack.c.h.b16 %v1836
      %v1874 = vunpack.c.l.b16 %v1837
      %v1875 = vunpack.c.h.b16 %v1837
      %v1876 = vunpack.c.l.b16 %v1838
      %v1877 = vunpack.c.h.b16 %v1838
      %v1878 = vunpack.c.l.b16 %v1839
      %v1879 = vunpack.c.h.b16 %v1839
      %v1880 = vunpack.c.l.b16 %v1840
      %v1881 = vunpack.c.h.b16 %v1840
      %v1882 = vunpack.c.l.b16 %v1841
      %v1883 = vunpack.c.h.b16 %v1841
      %v1884 = vunpack.c.l.b16 %v1842
      %v1885 = vunpack.c.h.b16 %v1842
      %v1886 = vunpack.c.l.b16 %v1843
      %v1887 = vunpack.c.h.b16 %v1843
      %v1888 = vunpack.c.l.b16 %v1844
      %v1889 = vunpack.c.h.b16 %v1844
      %v1890 = vunpack.c.l.b16 %v1845
      %v1891 = vunpack.c.h.b16 %v1845
      %v1892 = vunpack.c.l.b16 %v1846
      %v1893 = vunpack.c.h.b16 %v1846
      %v1894 = vunpack.c.l.b16 %v1847
      %v1895 = vunpack.c.h.b16 %v1847
      %v1896 = vpack.c.b16 %v1864, %v1864
      %v1897 = vpack.c.b16 %v1865, %v1865
      %v1898 = vpack.c.b16 %v1866, %v1866
      %v1899 = vpack.c.b16 %v1867, %v1867
      %v1900 = vpack.c.b16 %v1868, %v1868
      %v1901 = vpack.c.b16 %v1869, %v1869
      %v1902 = vpack.c.b16 %v1870, %v1870
      %v1903 = vpack.c.b16 %v1871, %v1871
      %v1904 = vpack.c.b16 %v1872, %v1872
      %v1905 = vpack.c.b16 %v1873, %v1873
      %v1906 = vpack.c.b16 %v1874, %v1874
      %v1907 = vpack.c.b16 %v1875, %v1875
      %v1908 = vpack.c.b16 %v1876, %v1876
      %v1909 = vpack.c.b16 %v1877, %v1877
      %v1910 = vpack.c.b16 %v1878, %v1878
      %v1911 = vpack.c.b16 %v1879, %v1879
      %v1912 = vpack.c.b16 %v1880, %v1880
      %v1913 = vpack.c.b16 %v1881, %v1881
      %v1914 = vpack.c.b16 %v1882, %v1882
      %v1915 = vpack.c.b16 %v1883, %v1883
      %v1916 = vpack.c.b16 %v1884, %v1884
      %v1917 = vpack.c.b16 %v1885, %v1885
      %v1918 = vpack.c.b16 %v1886, %v1886
      %v1919 = vpack.c.b16 %v1887, %v1887
      %v1920 = vpack.c.b16 %v1888, %v1888
      %v1921 = vpack.c.b16 %v1889, %v1889
      %v1922 = vpack.c.b16 %v1890, %v1890
      %v1923 = vpack.c.b16 %v1891, %v1891
      %v1924 = vpack.c.b16 %v1892, %v1892
      %v1925 = vpack.c.b16 %v1893, %v1893
      %v1926 = vpack.c.b16 %v1894, %v1894
      %v1927 = vpack.c.b16 %v1895, %v1895
      %vm1960 = vcmask 125952
      %1961 = vst.msk [vmem:[%s251] sm:$0xf] %vm1960, %v1896
      %1962 = vst.msk [vmem:[%s251 + $0x4] sm:$0xf] %vm1960, %v1897
      %1963 = vst.msk [vmem:[%s251 + $0x8] sm:$0xf] %vm1960, %v1898
      %1964 = vst.msk [vmem:[%s251 + $0xc] sm:$0xf] %vm1960, %v1899
      %1965 = vst.msk [vmem:[%s251 + $0x10] sm:$0xf] %vm1960, %v1900
      %1966 = vst.msk [vmem:[%s251 + $0x14] sm:$0xf] %vm1960, %v1901
      %1967 = vst.msk [vmem:[%s251 + $0x18] sm:$0xf] %vm1960, %v1902
      %1968 = vst.msk [vmem:[%s251 + $0x1c] sm:$0xf] %vm1960, %v1903
      %1969 = vst.msk [vmem:[%s251 + $0x20] sm:$0xf] %vm1960, %v1904
      %1970 = vst.msk [vmem:[%s251 + $0x24] sm:$0xf] %vm1960, %v1905
      %1971 = vst.msk [vmem:[%s251 + $0x28] sm:$0xf] %vm1960, %v1906
      %1972 = vst.msk [vmem:[%s251 + $0x2c] sm:$0xf] %vm1960, %v1907
      %1973 = vst.msk [vmem:[%s251 + $0x30] sm:$0xf] %vm1960, %v1908
      %1974 = vst.msk [vmem:[%s251 + $0x34] sm:$0xf] %vm1960, %v1909
      %1975 = vst.msk [vmem:[%s251 + $0x38] sm:$0xf] %vm1960, %v1910
      %1976 = vst.msk [vmem:[%s251 + $0x3c] sm:$0xf] %vm1960, %v1911
      %1977 = vst.msk [vmem:[%s251 + $0x40] sm:$0xf] %vm1960, %v1912
      %1978 = vst.msk [vmem:[%s251 + $0x44] sm:$0xf] %vm1960, %v1913
      %1979 = vst.msk [vmem:[%s251 + $0x48] sm:$0xf] %vm1960, %v1914
      %1980 = vst.msk [vmem:[%s251 + $0x4c] sm:$0xf] %vm1960, %v1915
      %1981 = vst.msk [vmem:[%s251 + $0x50] sm:$0xf] %vm1960, %v1916
      %1982 = vst.msk [vmem:[%s251 + $0x54] sm:$0xf] %vm1960, %v1917
      %1983 = vst.msk [vmem:[%s251 + $0x58] sm:$0xf] %vm1960, %v1918
      %1984 = vst.msk [vmem:[%s251 + $0x5c] sm:$0xf] %vm1960, %v1919
      %1985 = vst.msk [vmem:[%s251 + $0x60] sm:$0xf] %vm1960, %v1920
      %1986 = vst.msk [vmem:[%s251 + $0x64] sm:$0xf] %vm1960, %v1921
      %1987 = vst.msk [vmem:[%s251 + $0x68] sm:$0xf] %vm1960, %v1922
      %1988 = vst.msk [vmem:[%s251 + $0x6c] sm:$0xf] %vm1960, %v1923
      %1989 = vst.msk [vmem:[%s251 + $0x70] sm:$0xf] %vm1960, %v1924
      %1990 = vst.msk [vmem:[%s251 + $0x74] sm:$0xf] %vm1960, %v1925
      %1991 = vst.msk [vmem:[%s251 + $0x78] sm:$0xf] %vm1960, %v1926
      %1992 = vst.msk [vmem:[%s251 + $0x7c] sm:$0xf] %vm1960, %v1927
      %p1993 = scmp.lt.s32.totalorder %s17, 1
      %s1994 = scalar_select %p1993, %s17, 1
      %s1995 = smul.addr %s1994, 32
      %s1996 = smul.addr %s1995, 4
      %s1997 = scalar_lea.vmem %s6, %s1996
      // Predicated region
      $region45: #{conv_block_forward.1} parent=43 // pred_check
        %p1998 = pneg %p166
      $region46: #{conv_block_forward.1} parent=43 // pred_check_branch
        %2000 = sbr.rel (%p1998) target = $region48
      $region47: #{conv_block_forward.1} parent=43 // pred_region
        _
      $region48: #{conv_block_forward.1} parent=43 // pred_fallthru
        _
    $region44: #{conv_block_forward.1} parent=5 // pred_fallthru
      _
    %p2001 = scmp.le.s32.totalorder 2, %s12
    // Predicated region
    $region49: #{conv_block_forward.1} parent=5 // pred_check
      %p2002 = pneg %p2001
    $region50: #{conv_block_forward.1} parent=5 // pred_check_branch
      %2004 = sbr.rel (%p2002) target = $region52
    $region51: #{conv_block_forward.1} parent=5 // pred_region
      %s2005 = ssub.s32 %s12, 2
      // Predicated region
      $region53: #{conv_block_forward.1} parent=51 // pred_check
        %p2006 = pneg %p172
      $region54: #{conv_block_forward.1} parent=51 // pred_check_branch
        %2008 = sbr.rel (%p2006) target = $region56
      $region55: #{conv_block_forward.1} parent=51 // pred_region
        %p2009 = scmp.lt.s32.totalorder %s18, 1
        %s2010 = scalar_select %p2009, %s18, 1
        %s2011 = smul.addr %s2010, 32
        %s2012 = smul.addr %s2011, 4
        %s2013 = scalar_lea.vmem %s6, %s2012
      $region56: #{conv_block_forward.1} parent=51 // pred_fallthru
        _
    $region52: #{conv_block_forward.1} parent=5 // pred_fallthru
      _
  $region6: #{conv_block_forward.1} parent=0 // loop_footer
    %s16 = sadd.s32 1, %s12
  $region7: #{conv_block_forward.1} parent=0 // loop_footer_branch
    %11 = sbr.rel target = $region3
  $region8: #{conv_block_forward.1} parent=0 // loop_exit
    _

</llo_original>
